<compile_context>
chip_gen: v7x
topology: tpu7x:2x2x1
jax: 0.10.0
libtpu: 0.0.40
codegen_flags: <defaults>
</compile_context>

<pallas_src>
import functools

import jax
import jax.numpy as jnp
from jax.experimental import pallas as pl
from jax.experimental.pallas import tpu as pltpu


def _round_up(x, m):
    return (x + m - 1) // m * m


# ----------------------------------------------------------------------------
# Pallas kernel: (patches_bf16 @ W_bf16) [f32 acc] + shift, optional LeakyReLU
# ----------------------------------------------------------------------------
def _conv_mm_kernel(p_ref, w_ref, shift_ref, o_ref, *, apply_lrelu, slope):
    acc = jnp.dot(p_ref[...], w_ref[...], preferred_element_type=jnp.float32)
    y = acc + shift_ref[...]                      # f32 epilogue (v5e-friendly)
    if apply_lrelu:
        y = jnp.where(y >= 0.0, y, slope * y)
    o_ref[...] = y.astype(o_ref.dtype)


def conv_matmul(patches, w, shift, *, apply_lrelu, slope=0.2):
    """patches: (M, K) bf16, w: (K, C) bf16, shift: (1, C) f32.

    K and C must already be multiples of 128 (lane-dense loads/stores).
    Returns (Mp, C) f32 where Mp >= M (caller slices rows back).
    """
    M, K = patches.shape
    K2, C = w.shape
    assert K == K2 and K % 128 == 0 and C % 128 == 0

    # Choose a large M tile (better HBM roofline / fewer per-step overheads),
    # but keep >= 2 grid steps when possible so the parallel axis can be
    # sharded across the 2 TensorCores on v7x.
    m16 = _round_up(M, 16)
    tm = m16
    for cand in (1024, 512, 256, 128, 64, 32, 16):
        if cand <= m16 and pl.cdiv(m16, cand) >= 2:
            tm = cand
            break
    Mp = _round_up(m16, tm)
    if Mp != M:
        patches = jnp.pad(patches, ((0, Mp - M), (0, 0)))

    grid = (Mp // tm,)
    kernel = functools.partial(_conv_mm_kernel, apply_lrelu=apply_lrelu,
                               slope=slope)
    cost = pl.CostEstimate(
        flops=2 * Mp * K * C,
        transcendentals=0,
        bytes_accessed=Mp * K * 2 + K * C * 2 + C * 4 + Mp * C * 4,
    )
    return pl.pallas_call(
        kernel,
        out_shape=jax.ShapeDtypeStruct((Mp, C), jnp.float32),
        grid_spec=pltpu.PrefetchScalarGridSpec(
            num_scalar_prefetch=0,
            grid=grid,
            in_specs=[
                pl.BlockSpec((tm, K), lambda i: (i, 0)),   # patch tile
                pl.BlockSpec((K, C), lambda i: (0, 0)),    # resident weight
                pl.BlockSpec((1, C), lambda i: (0, 0)),    # per-channel shift
            ],
            out_specs=pl.BlockSpec((tm, C), lambda i: (i, 0)),
        ),
        compiler_params=pltpu.CompilerParams(
            dimension_semantics=("parallel",)),
        cost_estimate=cost,
    )(patches, w, shift)


# ----------------------------------------------------------------------------
# Glue: im2col patch extraction (layout plumbing, stays in plain JAX).
# Done in bf16 so the materialized patch matrix is half the HBM bytes.
# ----------------------------------------------------------------------------
def im2col(x_nhwc, k, stride, pad):
    N, H, W, C = x_nhwc.shape
    xp = jnp.pad(x_nhwc, ((0, 0), (pad, pad), (pad, pad), (0, 0)))
    Ho = (H + 2 * pad - k) // stride + 1
    Wo = (W + 2 * pad - k) // stride + 1
    cols = []
    for kh in range(k):
        for kw in range(k):
            cols.append(
                jax.lax.slice(
                    xp,
                    (0, kh, kw, 0),
                    (N, kh + stride * (Ho - 1) + 1, kw + stride * (Wo - 1) + 1, C),
                    (1, stride, stride, 1),
                )
            )
    patches = jnp.concatenate(cols, axis=-1)          # (N, Ho, Wo, k*k*C)
    return patches.reshape(N * Ho * Wo, k * k * C), (N, Ho, Wo)


# ----------------------------------------------------------------------------
# One conv (+ folded BN) (+ LeakyReLU) layer
# ----------------------------------------------------------------------------
def _layer(x_nhwc, w_oihw, bias, gamma=None, beta=None, mean=None, var=None,
           stride=2, pad=1, lrelu=True, eps=1e-5):
    cout, cin, k, _ = w_oihw.shape
    K = k * k * cin

    # im2col in bf16 (matmul operand precision; halves patch HBM traffic).
    patches, (N, Ho, Wo) = im2col(x_nhwc.astype(jnp.bfloat16), k, stride, pad)

    # (Cout,Cin,kh,kw) -> (kh,kw,Cin,Cout) -> (K,Cout): matches im2col order.
    wmat = jnp.transpose(w_oihw, (2, 3, 1, 0)).reshape(K, cout)

    if gamma is not None:  # eval-mode BatchNorm folding
        scale = gamma / jnp.sqrt(var + eps)
        shift = (bias - mean) * scale + beta
    else:
        scale = jnp.ones((cout,), jnp.float32)
        shift = bias

    # Fold multiplicative scale into the weights (exact): (P@W)*s == P@(W*s).
    wmat = wmat * scale[None, :]

    # Zero-pad K and Cout to multiples of 128 -> lane-dense loads and stores.
    Kp = _round_up(K, 128)
    Cp = _round_up(cout, 128)
    wmat = jnp.pad(wmat, ((0, Kp - K), (0, Cp - cout))).astype(jnp.bfloat16)
    shift_p = jnp.pad(shift, (0, Cp - cout)).reshape(1, Cp).astype(jnp.float32)
    patches = jnp.pad(patches, ((0, 0), (0, Kp - K)))

    y = conv_matmul(patches, wmat, shift_p, apply_lrelu=lrelu)
    y = y[: N * Ho * Wo, :cout]                       # drop M / channel padding
    return y.reshape(N, Ho, Wo, cout)


# ----------------------------------------------------------------------------
# Encoder forward: conv1_1 -> lrelu, conv2+BN -> lrelu, conv3+BN -> lrelu, conv4
# ----------------------------------------------------------------------------
def encoder_forward(x_nchw, p):
    x = jnp.transpose(x_nchw, (0, 2, 3, 1))  # NCHW -> NHWC
    x = _layer(x, p["w1"], p["b1"], stride=2, pad=1, lrelu=True)
    x = _layer(x, p["w2"], p["b2"], p["g2"], p["beta2"], p["m2"], p["v2"],
               stride=2, pad=1, lrelu=True)
    x = _layer(x, p["w3"], p["b3"], p["g3"], p["beta3"], p["m3"], p["v3"],
               stride=2, pad=1, lrelu=True)
    x = _layer(x, p["w4"], p["b4"], stride=1, pad=0, lrelu=False)
    return jnp.transpose(x, (0, 3, 1, 2))  # NHWC -> NCHW


# ----------------------------------------------------------------------------
# Deterministic parameter init (mirrors Encoder.weight_init(0, 0.02))
# ----------------------------------------------------------------------------
def init_params(key, channels, d, z_size, std=0.02):
    k1, k2, k3, k4 = jax.random.split(key, 4)

    def conv_w(k, cout, cin, ksz):
        return std * jax.random.normal(k, (cout, cin, ksz, ksz), jnp.float32)

    f32 = jnp.float32
    return {
        "w1": conv_w(k1, d, channels, 4), "b1": jnp.zeros((d,), f32),
        "w2": conv_w(k2, 2 * d, d, 4),    "b2": jnp.zeros((2 * d,), f32),
        "g2": jnp.ones((2 * d,), f32), "beta2": jnp.zeros((2 * d,), f32),
        "m2": jnp.zeros((2 * d,), f32), "v2": jnp.ones((2 * d,), f32),
        "w3": conv_w(k3, 4 * d, 2 * d, 4), "b3": jnp.zeros((4 * d,), f32),
        "g3": jnp.ones((4 * d,), f32), "beta3": jnp.zeros((4 * d,), f32),
        "m3": jnp.zeros((4 * d,), f32), "v3": jnp.ones((4 * d,), f32),
        "w4": conv_w(k4, z_size, 4 * d, 4), "b4": jnp.zeros((z_size,), f32),
    }


if __name__ == "__main__":
    key = jax.random.PRNGKey(0)
    k_x, k_p = jax.random.split(key)

    # Small shapes consistent with the module: 32x32 input so conv4 (k=4, s=1,
    # p=0) produces a 1x1 latent map, as in GPND.
    N, channels, H, W = 2, 1, 32, 32
    d, z_size = 8, 16

    x = jax.random.normal(k_x, (N, channels, H, W), jnp.float32)
    params = init_params(k_p, channels, d, z_size)

    out = jax.jit(encoder_forward)(x, params)
    out = jax.block_until_ready(out)

    assert out.shape == (N, z_size, 1, 1), out.shape
    print("KERNEL_OK")
</pallas_src>

<mosaic_0001>
module attributes {stable_mosaic.version = 11 : i64} {
  func.func @_conv_mm_kernel(%arg0: i32, %arg1: memref<256x128xbf16, #tpu.memory_space<vmem>>, %arg2: memref<128x128xbf16, #tpu.memory_space<vmem>>, %arg3: memref<1x128xf32, #tpu.memory_space<vmem>>, %arg4: memref<256x128xf32, #tpu.memory_space<vmem>>) attributes {dimension_semantics = [#tpu.dimension_semantics<parallel>], iteration_bounds = array<i64: 2>, scalar_prefetch = 0 : i64, scratch_operands = 0 : i64, tpu.core_type = #tpu.core_type<tc>, window_params = [{transform_indices = @transform_0, window_bounds = array<i64: 256, 128>}, {pipeline_mode = #tpu.pipeline_mode<synchronous>, transform_indices = @transform_1, window_bounds = array<i64: 128, 128>}, {pipeline_mode = #tpu.pipeline_mode<synchronous>, transform_indices = @transform_2, window_bounds = array<i64: 1, 128>}, {transform_indices = @transform_3, window_bounds = array<i64: 256, 128>}]} {
    %c0 = arith.constant 0 : index
    %c0_0 = arith.constant 0 : index
    %0 = vector.load %arg1[%c0, %c0_0] : memref<256x128xbf16, #tpu.memory_space<vmem>>, vector<256x128xbf16>
    %c0_1 = arith.constant 0 : index
    %c0_2 = arith.constant 0 : index
    %1 = vector.load %arg2[%c0_1, %c0_2] : memref<128x128xbf16, #tpu.memory_space<vmem>>, vector<128x128xbf16>
    %cst = arith.constant dense<0.000000e+00> : vector<256x128xf32>
    %2 = tpu.matmul %0, %1, %cst {dimension_numbers = #tpu.dot_dimension_numbers<[1], [0], [0], [1], [0, 0, 1, 1], [], []>} : vector<256x128xbf16>, vector<128x128xbf16>, vector<256x128xf32> -> vector<256x128xf32>
    %c0_3 = arith.constant 0 : index
    %c0_4 = arith.constant 0 : index
    %3 = vector.load %arg3[%c0_3, %c0_4] : memref<1x128xf32, #tpu.memory_space<vmem>>, vector<1x128xf32>
    %4 = vector.broadcast %3 : vector<1x128xf32> to vector<256x128xf32>
    %5 = arith.addf %2, %4 : vector<256x128xf32>
    %cst_5 = arith.constant 0.000000e+00 : f32
    %6 = vector.broadcast %cst_5 : f32 to vector<256x128xf32>
    %7 = arith.cmpf oge, %5, %6 : vector<256x128xf32>
    %cst_6 = arith.constant 2.000000e-01 : f32
    %8 = vector.broadcast %cst_6 : f32 to vector<256x128xf32>
    %9 = arith.mulf %8, %5 : vector<256x128xf32>
    %10 = arith.select %7, %5, %9 : vector<256x128xi1>, vector<256x128xf32>
    %c0_7 = arith.constant 0 : index
    %c0_8 = arith.constant 0 : index
    %11 = vector.load %arg4[%c0_7, %c0_8] : memref<256x128xf32, #tpu.memory_space<vmem>>, vector<256x128xf32>
    tpu.vector_store %arg4[%c0_7, %c0_8], %10 {strides = array<i32>} : memref<256x128xf32, #tpu.memory_space<vmem>>, vector<256x128xf32>,
    return
  }
  func.func @transform_0(%arg0: i32) -> (i32, i32) {
    %c0_i32 = arith.constant 0 : i32
    %c0_i32_0 = arith.constant 0 : i32
    return %arg0, %c0_i32 : i32, i32
  }
  func.func @transform_1(%arg0: i32) -> (i32, i32) {
    %c0_i32 = arith.constant 0 : i32
    %c0_i32_0 = arith.constant 0 : i32
    %c0_i32_1 = arith.constant 0 : i32
    return %c0_i32, %c0_i32_0 : i32, i32
  }
  func.func @transform_2(%arg0: i32) -> (i32, i32) {
    %c0_i32 = arith.constant 0 : i32
    %c0_i32_0 = arith.constant 0 : i32
    %c0_i32_1 = arith.constant 0 : i32
    return %c0_i32, %c0_i32_0 : i32, i32
  }
  func.func @transform_3(%arg0: i32) -> (i32, i32) {
    %c0_i32 = arith.constant 0 : i32
    %c0_i32_0 = arith.constant 0 : i32
    return %arg0, %c0_i32 : i32, i32
  }
}

module attributes {stable_mosaic.version = 11 : i64} {
  func.func @_conv_mm_kernel(%arg0: i32, %arg1: memref<64x128xbf16, #tpu.memory_space<vmem>>, %arg2: memref<128x128xbf16, #tpu.memory_space<vmem>>, %arg3: memref<1x128xf32, #tpu.memory_space<vmem>>, %arg4: memref<64x128xf32, #tpu.memory_space<vmem>>) attributes {dimension_semantics = [#tpu.dimension_semantics<parallel>], iteration_bounds = array<i64: 2>, scalar_prefetch = 0 : i64, scratch_operands = 0 : i64, tpu.core_type = #tpu.core_type<tc>, window_params = [{transform_indices = @transform_0, window_bounds = array<i64: 64, 128>}, {pipeline_mode = #tpu.pipeline_mode<synchronous>, transform_indices = @transform_1, window_bounds = array<i64: 128, 128>}, {pipeline_mode = #tpu.pipeline_mode<synchronous>, transform_indices = @transform_2, window_bounds = array<i64: 1, 128>}, {transform_indices = @transform_3, window_bounds = array<i64: 64, 128>}]} {
    %c0 = arith.constant 0 : index
    %c0_0 = arith.constant 0 : index
    %0 = vector.load %arg1[%c0, %c0_0] : memref<64x128xbf16, #tpu.memory_space<vmem>>, vector<64x128xbf16>
    %c0_1 = arith.constant 0 : index
    %c0_2 = arith.constant 0 : index
    %1 = vector.load %arg2[%c0_1, %c0_2] : memref<128x128xbf16, #tpu.memory_space<vmem>>, vector<128x128xbf16>
    %cst = arith.constant dense<0.000000e+00> : vector<64x128xf32>
    %2 = tpu.matmul %0, %1, %cst {dimension_numbers = #tpu.dot_dimension_numbers<[1], [0], [0], [1], [0, 0, 1, 1], [], []>} : vector<64x128xbf16>, vector<128x128xbf16>, vector<64x128xf32> -> vector<64x128xf32>
    %c0_3 = arith.constant 0 : index
    %c0_4 = arith.constant 0 : index
    %3 = vector.load %arg3[%c0_3, %c0_4] : memref<1x128xf32, #tpu.memory_space<vmem>>, vector<1x128xf32>
    %4 = vector.broadcast %3 : vector<1x128xf32> to vector<64x128xf32>
    %5 = arith.addf %2, %4 : vector<64x128xf32>
    %cst_5 = arith.constant 0.000000e+00 : f32
    %6 = vector.broadcast %cst_5 : f32 to vector<64x128xf32>
    %7 = arith.cmpf oge, %5, %6 : vector<64x128xf32>
    %cst_6 = arith.constant 2.000000e-01 : f32
    %8 = vector.broadcast %cst_6 : f32 to vector<64x128xf32>
    %9 = arith.mulf %8, %5 : vector<64x128xf32>
    %10 = arith.select %7, %5, %9 : vector<64x128xi1>, vector<64x128xf32>
    %c0_7 = arith.constant 0 : index
    %c0_8 = arith.constant 0 : index
    %11 = vector.load %arg4[%c0_7, %c0_8] : memref<64x128xf32, #tpu.memory_space<vmem>>, vector<64x128xf32>
    tpu.vector_store %arg4[%c0_7, %c0_8], %10 {strides = array<i32>} : memref<64x128xf32, #tpu.memory_space<vmem>>, vector<64x128xf32>,
    return
  }
  func.func @transform_0(%arg0: i32) -> (i32, i32) {
    %c0_i32 = arith.constant 0 : i32
    %c0_i32_0 = arith.constant 0 : i32
    return %arg0, %c0_i32 : i32, i32
  }
  func.func @transform_1(%arg0: i32) -> (i32, i32) {
    %c0_i32 = arith.constant 0 : i32
    %c0_i32_0 = arith.constant 0 : i32
    %c0_i32_1 = arith.constant 0 : i32
    return %c0_i32, %c0_i32_0 : i32, i32
  }
  func.func @transform_2(%arg0: i32) -> (i32, i32) {
    %c0_i32 = arith.constant 0 : i32
    %c0_i32_0 = arith.constant 0 : i32
    %c0_i32_1 = arith.constant 0 : i32
    return %c0_i32, %c0_i32_0 : i32, i32
  }
  func.func @transform_3(%arg0: i32) -> (i32, i32) {
    %c0_i32 = arith.constant 0 : i32
    %c0_i32_0 = arith.constant 0 : i32
    return %arg0, %c0_i32 : i32, i32
  }
}

module attributes {stable_mosaic.version = 11 : i64} {
  func.func @_conv_mm_kernel(%arg0: i32, %arg1: memref<16x256xbf16, #tpu.memory_space<vmem>>, %arg2: memref<256x128xbf16, #tpu.memory_space<vmem>>, %arg3: memref<1x128xf32, #tpu.memory_space<vmem>>, %arg4: memref<16x128xf32, #tpu.memory_space<vmem>>) attributes {dimension_semantics = [#tpu.dimension_semantics<parallel>], iteration_bounds = array<i64: 2>, scalar_prefetch = 0 : i64, scratch_operands = 0 : i64, tpu.core_type = #tpu.core_type<tc>, window_params = [{transform_indices = @transform_0, window_bounds = array<i64: 16, 256>}, {pipeline_mode = #tpu.pipeline_mode<synchronous>, transform_indices = @transform_1, window_bounds = array<i64: 256, 128>}, {pipeline_mode = #tpu.pipeline_mode<synchronous>, transform_indices = @transform_2, window_bounds = array<i64: 1, 128>}, {transform_indices = @transform_3, window_bounds = array<i64: 16, 128>}]} {
    %c0 = arith.constant 0 : index
    %c0_0 = arith.constant 0 : index
    %0 = vector.load %arg1[%c0, %c0_0] : memref<16x256xbf16, #tpu.memory_space<vmem>>, vector<16x256xbf16>
    %c0_1 = arith.constant 0 : index
    %c0_2 = arith.constant 0 : index
    %1 = vector.load %arg2[%c0_1, %c0_2] : memref<256x128xbf16, #tpu.memory_space<vmem>>, vector<256x128xbf16>
    %cst = arith.constant dense<0.000000e+00> : vector<16x128xf32>
    %2 = tpu.matmul %0, %1, %cst {dimension_numbers = #tpu.dot_dimension_numbers<[1], [0], [0], [1], [0, 0, 1, 1], [], []>} : vector<16x256xbf16>, vector<256x128xbf16>, vector<16x128xf32> -> vector<16x128xf32>
    %c0_3 = arith.constant 0 : index
    %c0_4 = arith.constant 0 : index
    %3 = vector.load %arg3[%c0_3, %c0_4] : memref<1x128xf32, #tpu.memory_space<vmem>>, vector<1x128xf32>
    %4 = vector.broadcast %3 : vector<1x128xf32> to vector<16x128xf32>
    %5 = arith.addf %2, %4 : vector<16x128xf32>
    %cst_5 = arith.constant 0.000000e+00 : f32
    %6 = vector.broadcast %cst_5 : f32 to vector<16x128xf32>
    %7 = arith.cmpf oge, %5, %6 : vector<16x128xf32>
    %cst_6 = arith.constant 2.000000e-01 : f32
    %8 = vector.broadcast %cst_6 : f32 to vector<16x128xf32>
    %9 = arith.mulf %8, %5 : vector<16x128xf32>
    %10 = arith.select %7, %5, %9 : vector<16x128xi1>, vector<16x128xf32>
    %c0_7 = arith.constant 0 : index
    %c0_8 = arith.constant 0 : index
    %11 = vector.load %arg4[%c0_7, %c0_8] : memref<16x128xf32, #tpu.memory_space<vmem>>, vector<16x128xf32>
    tpu.vector_store %arg4[%c0_7, %c0_8], %10 {strides = array<i32>} : memref<16x128xf32, #tpu.memory_space<vmem>>, vector<16x128xf32>,
    return
  }
  func.func @transform_0(%arg0: i32) -> (i32, i32) {
    %c0_i32 = arith.constant 0 : i32
    %c0_i32_0 = arith.constant 0 : i32
    return %arg0, %c0_i32 : i32, i32
  }
  func.func @transform_1(%arg0: i32) -> (i32, i32) {
    %c0_i32 = arith.constant 0 : i32
    %c0_i32_0 = arith.constant 0 : i32
    %c0_i32_1 = arith.constant 0 : i32
    return %c0_i32, %c0_i32_0 : i32, i32
  }
  func.func @transform_2(%arg0: i32) -> (i32, i32) {
    %c0_i32 = arith.constant 0 : i32
    %c0_i32_0 = arith.constant 0 : i32
    %c0_i32_1 = arith.constant 0 : i32
    return %c0_i32, %c0_i32_0 : i32, i32
  }
  func.func @transform_3(%arg0: i32) -> (i32, i32) {
    %c0_i32 = arith.constant 0 : i32
    %c0_i32_0 = arith.constant 0 : i32
    return %arg0, %c0_i32 : i32, i32
  }
}

module attributes {stable_mosaic.version = 11 : i64} {
  func.func @_conv_mm_kernel(%arg0: i32, %arg1: memref<16x512xbf16, #tpu.memory_space<vmem>>, %arg2: memref<512x128xbf16, #tpu.memory_space<vmem>>, %arg3: memref<1x128xf32, #tpu.memory_space<vmem>>, %arg4: memref<16x128xf32, #tpu.memory_space<vmem>>) attributes {dimension_semantics = [#tpu.dimension_semantics<parallel>], iteration_bounds = array<i64: 1>, scalar_prefetch = 0 : i64, scratch_operands = 0 : i64, tpu.core_type = #tpu.core_type<tc>, window_params = [{transform_indices = @transform_0, window_bounds = array<i64: 16, 512>}, {pipeline_mode = #tpu.pipeline_mode<synchronous>, transform_indices = @transform_1, window_bounds = array<i64: 512, 128>}, {pipeline_mode = #tpu.pipeline_mode<synchronous>, transform_indices = @transform_2, window_bounds = array<i64: 1, 128>}, {transform_indices = @transform_3, window_bounds = array<i64: 16, 128>}]} {
    %c0 = arith.constant 0 : index
    %c0_0 = arith.constant 0 : index
    %0 = vector.load %arg1[%c0, %c0_0] : memref<16x512xbf16, #tpu.memory_space<vmem>>, vector<16x512xbf16>
    %c0_1 = arith.constant 0 : index
    %c0_2 = arith.constant 0 : index
    %1 = vector.load %arg2[%c0_1, %c0_2] : memref<512x128xbf16, #tpu.memory_space<vmem>>, vector<512x128xbf16>
    %cst = arith.constant dense<0.000000e+00> : vector<16x128xf32>
    %2 = tpu.matmul %0, %1, %cst {dimension_numbers = #tpu.dot_dimension_numbers<[1], [0], [0], [1], [0, 0, 1, 1], [], []>} : vector<16x512xbf16>, vector<512x128xbf16>, vector<16x128xf32> -> vector<16x128xf32>
    %c0_3 = arith.constant 0 : index
    %c0_4 = arith.constant 0 : index
    %3 = vector.load %arg3[%c0_3, %c0_4] : memref<1x128xf32, #tpu.memory_space<vmem>>, vector<1x128xf32>
    %4 = vector.broadcast %3 : vector<1x128xf32> to vector<16x128xf32>
    %5 = arith.addf %2, %4 : vector<16x128xf32>
    %c0_5 = arith.constant 0 : index
    %c0_6 = arith.constant 0 : index
    %6 = vector.load %arg4[%c0_5, %c0_6] : memref<16x128xf32, #tpu.memory_space<vmem>>, vector<16x128xf32>
    tpu.vector_store %arg4[%c0_5, %c0_6], %5 {strides = array<i32>} : memref<16x128xf32, #tpu.memory_space<vmem>>, vector<16x128xf32>,
    return
  }
  func.func @transform_0(%arg0: i32) -> (i32, i32) {
    %c0_i32 = arith.constant 0 : i32
    %c0_i32_0 = arith.constant 0 : i32
    return %arg0, %c0_i32 : i32, i32
  }
  func.func @transform_1(%arg0: i32) -> (i32, i32) {
    %c0_i32 = arith.constant 0 : i32
    %c0_i32_0 = arith.constant 0 : i32
    %c0_i32_1 = arith.constant 0 : i32
    return %c0_i32, %c0_i32_0 : i32, i32
  }
  func.func @transform_2(%arg0: i32) -> (i32, i32) {
    %c0_i32 = arith.constant 0 : i32
    %c0_i32_0 = arith.constant 0 : i32
    %c0_i32_1 = arith.constant 0 : i32
    return %c0_i32, %c0_i32_0 : i32, i32
  }
  func.func @transform_3(%arg0: i32) -> (i32, i32) {
    %c0_i32 = arith.constant 0 : i32
    %c0_i32_0 = arith.constant 0 : i32
    return %arg0, %c0_i32 : i32, i32
  }
}

</mosaic_0001>

<llo_original>
// kernel: encoder_forward.4
$region0: #{encoder_forward.4}
  #allocation0 [shape = 'u32[]', space=smem, size = 0x4, offset = 0x4, fixed_abs, tag = 'smem constant byte address 0x4 - core index']
  #allocation1 [shape = 'u32[144,128]{1,0:T(1,128)}', space=vmem, size = 0x12000, scoped, tag = 'internal scratch']
  %s0 = inlined_call_operand.vmem [shape: bf16[512,128], index: 0, kind: input, shape index: {}]
  %s1 = inlined_call_operand.vmem [shape: bf16[128,128], index: 1, kind: input, shape index: {}]
  %s2 = inlined_call_operand.vmem [shape: f32[1,128], index: 2, kind: input, shape index: {}]
  %s3 = inlined_call_operand.vmem [shape: f32[512,128], index: 3, kind: output, shape index: {}]
  %s4 = sld [smem:[#allocation0]]
  $region45: #{encoder_forward.4} parent=0
    _
  %s6 = ssub.s32 1, %s4
  %s7 = scalar_select 0, %s6, %s4
  loop: start=0, step=1, limit=4
  $region2: #{encoder_forward.4} parent=0 // loop_pre_header
    _
  $region3: #{encoder_forward.4} parent=0 // loop_header
    %s9 = sphi 0, %s13
    %p10 = scmp.ge.s32.totalorder %s9, 4
    %s19 = sphi 0, %s21
    %s22 = sphi 0, %s19
    %s23 = sphi 0, %s22
    %s39 = sphi 0, %s23
    %s43 = sphi 0, %s43
    %s45 = sphi 0, %s43
    %s46 = sphi 0, %s45
    %s60 = sphi 0, %s46
    %s64 = sphi 0, %s64
    %s66 = sphi 0, %s64
    %s67 = sphi 0, %s66
    %s81 = sphi 0, %s67
    %s87 = sphi 0, %s89
    %s90 = sphi 0, %s87
    %s91 = sphi 0, %s90
    %s107 = sphi 0, %s91
  $region4: #{encoder_forward.4} parent=0 // loop_header_branch
    %12 = sbr.rel (%p10) target = $region8
  $region5: #{encoder_forward.4} parent=0 // loop_body
    %s14 = ssub.s32 %s9, 1
    %s15 = ssub.s32 %s9, 2
    %s16 = sadd.s32 %s9, 1
    %s17 = ssub.s32 %s9, %s16
    %p18 = scmp.eq.s32.totalorder %s17, 0
    %s20 = sadd.s32 %s19, 1
    %s21 = scalar_select %p18, %s19, %s20
    %p24 = pneg %p18
    %p25 = scmp.eq.s32.totalorder %s9, 1
    %p26 = por %p24, %p25
    %p27 = scmp.ne.s32.totalorder %s19, %s22
    %p28 = scmp.eq.s32.totalorder %s9, 0
    %p29 = por %p27, %p28
    %p30 = scmp.ne.s32.totalorder %s19, %s22
    %p31 = scmp.eq.s32.totalorder %s14, 1
    %p32 = por %p30, %p31
    %p33 = scmp.ne.s32.totalorder %s22, %s23
    %p34 = scmp.eq.s32.totalorder %s14, 0
    %p35 = por %p33, %p34
    %p36 = scmp.ne.s32.totalorder %s22, %s23
    %p37 = scmp.eq.s32.totalorder %s15, 1
    %p38 = por %p36, %p37
    %p40 = scmp.ne.s32.totalorder %s23, %s39
    %p41 = scmp.eq.s32.totalorder %s15, 0
    %p42 = por %p40, %p41
    %s44 = sadd.s32 %s43, 1
    %p47 = scmp.eq.s32.totalorder %s9, 1
    %p48 = scmp.ne.s32.totalorder %s43, %s45
    %p49 = scmp.eq.s32.totalorder %s9, 0
    %p50 = por %p48, %p49
    %p51 = scmp.ne.s32.totalorder %s43, %s45
    %p52 = scmp.eq.s32.totalorder %s14, 1
    %p53 = por %p51, %p52
    %p54 = scmp.ne.s32.totalorder %s45, %s46
    %p55 = scmp.eq.s32.totalorder %s14, 0
    %p56 = por %p54, %p55
    %p57 = scmp.ne.s32.totalorder %s45, %s46
    %p58 = scmp.eq.s32.totalorder %s15, 1
    %p59 = por %p57, %p58
    %p61 = scmp.ne.s32.totalorder %s46, %s60
    %p62 = scmp.eq.s32.totalorder %s15, 0
    %p63 = por %p61, %p62
    %s65 = sadd.s32 %s64, 1
    %p68 = scmp.eq.s32.totalorder %s9, 1
    %p69 = scmp.ne.s32.totalorder %s64, %s66
    %p70 = scmp.eq.s32.totalorder %s9, 0
    %p71 = por %p69, %p70
    %p72 = scmp.ne.s32.totalorder %s64, %s66
    %p73 = scmp.eq.s32.totalorder %s14, 1
    %p74 = por %p72, %p73
    %p75 = scmp.ne.s32.totalorder %s66, %s67
    %p76 = scmp.eq.s32.totalorder %s14, 0
    %p77 = por %p75, %p76
    %p78 = scmp.ne.s32.totalorder %s66, %s67
    %p79 = scmp.eq.s32.totalorder %s15, 1
    %p80 = por %p78, %p79
    %p82 = scmp.ne.s32.totalorder %s67, %s81
    %p83 = scmp.eq.s32.totalorder %s15, 0
    %p84 = por %p82, %p83
    %s85 = ssub.s32 %s9, %s16
    %p86 = scmp.eq.s32.totalorder %s85, 0
    %s88 = sadd.s32 %s87, 1
    %s89 = scalar_select %p86, %s87, %s88
    %p92 = pneg %p86
    %p93 = scmp.eq.s32.totalorder %s9, 1
    %p94 = por %p92, %p93
    %p95 = scmp.ne.s32.totalorder %s87, %s90
    %p96 = scmp.eq.s32.totalorder %s9, 0
    %p97 = por %p95, %p96
    %p98 = scmp.ne.s32.totalorder %s87, %s90
    %p99 = scmp.eq.s32.totalorder %s14, 1
    %p100 = por %p98, %p99
    %p101 = scmp.ne.s32.totalorder %s90, %s91
    %p102 = scmp.eq.s32.totalorder %s14, 0
    %p103 = por %p101, %p102
    %p104 = scmp.ne.s32.totalorder %s90, %s91
    %p105 = scmp.eq.s32.totalorder %s15, 1
    %p106 = por %p104, %p105
    %p108 = scmp.ne.s32.totalorder %s91, %s107
    %p109 = scmp.eq.s32.totalorder %s15, 0
    %p110 = por %p108, %p109
    %p111 = scmp.le.s32.totalorder 1, %s9
    %p112 = scmp.lt.s32.totalorder %s9, 3
    %p113 = pnand %p111, %p112
    %p114 = pneg %p113
    // Predicated region
    $region9: #{encoder_forward.4} parent=5 // pred_check
      _
    $region10: #{encoder_forward.4} parent=5 // pred_check_branch
      %116 = sbr.rel (%p113) target = $region12
    $region11: #{encoder_forward.4} parent=5 // pred_region
      %s117 = ssub.s32 %s9, 1
      // Predicated region
      $region13: #{encoder_forward.4} parent=11 // pred_check
        %p118 = pneg %p56
      $region14: #{encoder_forward.4} parent=11 // pred_check_branch
        %120 = sbr.rel (%p118) target = $region16
      $region15: #{encoder_forward.4} parent=11 // pred_region
        _
      $region16: #{encoder_forward.4} parent=11 // pred_fallthru
        _
      // Predicated region
      $region17: #{encoder_forward.4} parent=11 // pred_check
        %p121 = pneg %p77
      $region18: #{encoder_forward.4} parent=11 // pred_check_branch
        %123 = sbr.rel (%p121) target = $region20
      $region19: #{encoder_forward.4} parent=11 // pred_region
        _
      $region20: #{encoder_forward.4} parent=11 // pred_fallthru
        _
    $region12: #{encoder_forward.4} parent=5 // pred_fallthru
      _
    %p124 = scmp.lt.s32.totalorder %s9, 2
    // Predicated region
    $region21: #{encoder_forward.4} parent=5 // pred_check
      %p125 = pneg %p124
    $region22: #{encoder_forward.4} parent=5 // pred_check_branch
      %127 = sbr.rel (%p125) target = $region24
    $region23: #{encoder_forward.4} parent=5 // pred_region
      // Predicated region
      $region25: #{encoder_forward.4} parent=23 // pred_check
        %p128 = pneg %p29
      $region26: #{encoder_forward.4} parent=23 // pred_check_branch
        %130 = sbr.rel (%p128) target = $region28
      $region27: #{encoder_forward.4} parent=23 // pred_region
        %s131 = smul.u32 32, %s9
        %p132 = scmp.lt.s32.totalorder %s131, 63
        %s133 = scalar_select %p132, %s131, 63
        %s134 = smul.addr %s133, 4
        %s135 = scalar_lea.vmem %s0, %s134
        %s136 = smul.u32 32, %s9
      $region28: #{encoder_forward.4} parent=23 // pred_fallthru
        _
    $region24: #{encoder_forward.4} parent=5 // pred_fallthru
      _
    %p137 = scmp.le.s32.totalorder 1, %s9
    %p138 = scmp.lt.s32.totalorder %s9, 3
    %p139 = pnand %p137, %p138
    %p140 = pneg %p139
    // Predicated region
    $region29: #{encoder_forward.4} parent=5 // pred_check
      _
    $region30: #{encoder_forward.4} parent=5 // pred_check_branch
      %142 = sbr.rel (%p139) target = $region32
    $region31: #{encoder_forward.4} parent=5 // pred_region
      %s143 = ssub.s32 %s9, 1
      %s144 = smul.u32 32, %s14
      %p145 = scmp.lt.s32.totalorder %s144, 63
      %s146 = scalar_select %p145, %s144, 63
      %s147 = smul.addr %s146, 4
      %s148 = scalar_lea.vmem %s0, %s147
      %p149 = pneg %p35
      %p150 = pneg %p32
      %p151 = pneg %p56
      %p152 = pneg %p53
      %p153 = pneg %p77
      %p154 = pneg %p74
      %p155 = pneg %p103
      %p156 = pneg %p100
      %s157 = smul.u32 32, %s14
      %p158 = scmp.lt.s32.totalorder %s157, 63
      %s159 = scalar_select %p158, %s157, 63
      %s160 = smul.addr %s159, 8
      %s161 = scalar_lea.vmem %s3, %s160
      %s162 = smul.u32 32, %s14
      %p163 = scmp.lt.s32.totalorder %s162, 63
      %s164 = scalar_select %p163, %s162, 63
      %s165 = smul.addr %s164, 4
      %s166 = scalar_lea.vmem %s0, %s165
      %s167 = smul.u32 32, %s14
      %s168 = smul.u32 32, %s14
      %p169 = scmp.lt.s32.totalorder %s168, 63
      %s170 = scalar_select %p169, %s168, 63
      %s171 = smul.addr %s170, 8
      %s172 = scalar_lea.vmem %s3, %s171
      %s173 = smul.u32 32, %s14
      %v175 = vld [vmem:[%s166] sm:$0xf]
      %v176 = vld [vmem:[%s166 + $0x4] sm:$0xf]
      %v177 = vld [vmem:[%s166 + $0x8] sm:$0xf]
      %v178 = vld [vmem:[%s166 + $0xc] sm:$0xf]
      %v179 = vld [vmem:[%s166 + $0x10] sm:$0xf]
      %v180 = vld [vmem:[%s166 + $0x14] sm:$0xf]
      %v181 = vld [vmem:[%s166 + $0x18] sm:$0xf]
      %v182 = vld [vmem:[%s166 + $0x1c] sm:$0xf]
      %v183 = vld [vmem:[%s166 + $0x20] sm:$0xf]
      %v184 = vld [vmem:[%s166 + $0x24] sm:$0xf]
      %v185 = vld [vmem:[%s166 + $0x28] sm:$0xf]
      %v186 = vld [vmem:[%s166 + $0x2c] sm:$0xf]
      %v187 = vld [vmem:[%s166 + $0x30] sm:$0xf]
      %v188 = vld [vmem:[%s166 + $0x34] sm:$0xf]
      %v189 = vld [vmem:[%s166 + $0x38] sm:$0xf]
      %v190 = vld [vmem:[%s166 + $0x3c] sm:$0xf]
      %v191 = vld [vmem:[%s166 + $0x40] sm:$0xf]
      %v192 = vld [vmem:[%s166 + $0x44] sm:$0xf]
      %v193 = vld [vmem:[%s166 + $0x48] sm:$0xf]
      %v194 = vld [vmem:[%s166 + $0x4c] sm:$0xf]
      %v195 = vld [vmem:[%s166 + $0x50] sm:$0xf]
      %v196 = vld [vmem:[%s166 + $0x54] sm:$0xf]
      %v197 = vld [vmem:[%s166 + $0x58] sm:$0xf]
      %v198 = vld [vmem:[%s166 + $0x5c] sm:$0xf]
      %v199 = vld [vmem:[%s166 + $0x60] sm:$0xf]
      %v200 = vld [vmem:[%s166 + $0x64] sm:$0xf]
      %v201 = vld [vmem:[%s166 + $0x68] sm:$0xf]
      %v202 = vld [vmem:[%s166 + $0x6c] sm:$0xf]
      %v203 = vld [vmem:[%s166 + $0x70] sm:$0xf]
      %v204 = vld [vmem:[%s166 + $0x74] sm:$0xf]
      %v205 = vld [vmem:[%s166 + $0x78] sm:$0xf]
      %v206 = vld [vmem:[%s166 + $0x7c] sm:$0xf]
      %v207 = vld [vmem:[%s1] sm:$0xf]
      %v208 = vld [vmem:[%s1 + $0x4] sm:$0xf]
      %v209 = vld [vmem:[%s1 + $0x8] sm:$0xf]
      %v210 = vld [vmem:[%s1 + $0xc] sm:$0xf]
      %v211 = vld [vmem:[%s1 + $0x10] sm:$0xf]
      %v212 = vld [vmem:[%s1 + $0x14] sm:$0xf]
      %v213 = vld [vmem:[%s1 + $0x18] sm:$0xf]
      %v214 = vld [vmem:[%s1 + $0x1c] sm:$0xf]
      %v215 = vld [vmem:[%s1 + $0x20] sm:$0xf]
      %v216 = vld [vmem:[%s1 + $0x24] sm:$0xf]
      %v217 = vld [vmem:[%s1 + $0x28] sm:$0xf]
      %v218 = vld [vmem:[%s1 + $0x2c] sm:$0xf]
      %v219 = vld [vmem:[%s1 + $0x30] sm:$0xf]
      %v220 = vld [vmem:[%s1 + $0x34] sm:$0xf]
      %v221 = vld [vmem:[%s1 + $0x38] sm:$0xf]
      %v222 = vld [vmem:[%s1 + $0x3c] sm:$0xf]
      %v223 = vld [vmem:[%s2] sm:$0x1]
      %v225 = vlaneseq
      %v226 = vshrl.u32 %v225, 7
      %v227 = vsub.s32 0, %v226
      %v228 = vrot.slane %v223, %v227
      %v262 = vunpack.c.l.b16 %v175
      %v263 = vunpack.c.l.b16 %v176
      %v264 = vunpack.c.l.b16 %v177
      %v265 = vunpack.c.l.b16 %v178
      %v266 = vunpack.c.l.b16 %v179
      %v267 = vunpack.c.l.b16 %v180
      %v268 = vunpack.c.l.b16 %v181
      %v269 = vunpack.c.l.b16 %v182
      %v270 = vunpack.c.l.b16 %v183
      %v271 = vunpack.c.l.b16 %v184
      %v272 = vunpack.c.l.b16 %v185
      %v273 = vunpack.c.l.b16 %v186
      %v274 = vunpack.c.l.b16 %v187
      %v275 = vunpack.c.l.b16 %v188
      %v276 = vunpack.c.l.b16 %v189
      %v277 = vunpack.c.l.b16 %v190
      %v278 = vunpack.c.l.b16 %v191
      %v279 = vunpack.c.l.b16 %v192
      %v280 = vunpack.c.l.b16 %v193
      %v281 = vunpack.c.l.b16 %v194
      %v282 = vunpack.c.l.b16 %v195
      %v283 = vunpack.c.l.b16 %v196
      %v284 = vunpack.c.l.b16 %v197
      %v285 = vunpack.c.l.b16 %v198
      %v286 = vunpack.c.l.b16 %v199
      %v287 = vunpack.c.l.b16 %v200
      %v288 = vunpack.c.l.b16 %v201
      %v289 = vunpack.c.l.b16 %v202
      %v290 = vunpack.c.l.b16 %v203
      %v291 = vunpack.c.l.b16 %v204
      %v292 = vunpack.c.l.b16 %v205
      %v293 = vunpack.c.l.b16 %v206
      %v294 = vpack.c.b16 %v263, %v262
      %v295 = vpack.c.b16 %v265, %v264
      %v296 = vpack.c.b16 %v267, %v266
      %v297 = vpack.c.b16 %v269, %v268
      %v298 = vpack.c.b16 %v271, %v270
      %v299 = vpack.c.b16 %v273, %v272
      %v300 = vpack.c.b16 %v275, %v274
      %v301 = vpack.c.b16 %v277, %v276
      %v302 = vpack.c.b16 %v279, %v278
      %v303 = vpack.c.b16 %v281, %v280
      %v304 = vpack.c.b16 %v283, %v282
      %v305 = vpack.c.b16 %v285, %v284
      %v306 = vpack.c.b16 %v287, %v286
      %v307 = vpack.c.b16 %v289, %v288
      %v308 = vpack.c.b16 %v291, %v290
      %v309 = vpack.c.b16 %v293, %v292
      %v342 = vunpack.c.l.b16 %v207
      %v343 = vunpack.c.l.b16 %v208
      %v344 = vunpack.c.l.b16 %v209
      %v345 = vunpack.c.l.b16 %v210
      %v346 = vunpack.c.l.b16 %v211
      %v347 = vunpack.c.l.b16 %v212
      %v348 = vunpack.c.l.b16 %v213
      %v349 = vunpack.c.l.b16 %v214
      %v350 = vunpack.c.l.b16 %v215
      %v351 = vunpack.c.l.b16 %v216
      %v352 = vunpack.c.l.b16 %v217
      %v353 = vunpack.c.l.b16 %v218
      %v354 = vunpack.c.l.b16 %v219
      %v355 = vunpack.c.l.b16 %v220
      %v356 = vunpack.c.l.b16 %v221
      %v357 = vunpack.c.l.b16 %v222
      %v358 = vpack.c.b16 %v343, %v342
      %v359 = vpack.c.b16 %v345, %v344
      %v360 = vpack.c.b16 %v347, %v346
      %v361 = vpack.c.b16 %v349, %v348
      %v362 = vpack.c.b16 %v351, %v350
      %v363 = vpack.c.b16 %v353, %v352
      %v364 = vpack.c.b16 %v355, %v354
      %v365 = vpack.c.b16 %v357, %v356
      %374 = vmatprep.subr.bf16.mxu0 0
      %375 = vmatpush1.bf16.msra.mxu0 %v358
      %376 = vmatprep.subr.bf16.mxu0 0
      %377 = vmatpush1.bf16.msra.mxu0 %v359
      %378 = vmatprep.subr.bf16.mxu0 0
      %379 = vmatpush1.bf16.msra.mxu0 %v360
      %380 = vmatprep.subr.bf16.mxu0 0
      %381 = vmatpush1.bf16.msra.mxu0 %v361
      %382 = vmatprep.subr.bf16.mxu0 0
      %383 = vmatpush1.bf16.msra.mxu0 %v362
      %384 = vmatprep.subr.bf16.mxu0 0
      %385 = vmatpush1.bf16.msra.mxu0 %v363
      %386 = vmatprep.subr.bf16.mxu0 0
      %387 = vmatpush1.bf16.msra.mxu0 %v364
      %388 = vmatprep.subr.bf16.mxu0 0
      %389 = vmatpush1.bf16.msra.mxu0 %v365
      %390 = vmatprep.subr.bf16.mxu0 0
      %391 = vmatpush1.bf16.msra.mxu0 0
      %392 = vmatprep.subr.bf16.mxu0 0
      %393 = vmatpush1.bf16.msra.mxu0 0
      %394 = vmatprep.subr.bf16.mxu0 0
      %395 = vmatpush1.bf16.msra.mxu0 0
      %396 = vmatprep.subr.bf16.mxu0 0
      %397 = vmatpush1.bf16.msra.mxu0 0
      %398 = vmatprep.subr.bf16.mxu0 0
      %399 = vmatpush1.bf16.msra.mxu0 0
      %400 = vmatprep.subr.bf16.mxu0 0
      %401 = vmatpush1.bf16.msra.mxu0 0
      %402 = vmatprep.subr.bf16.mxu0 0
      %403 = vmatpush1.bf16.msra.mxu0 0
      %404 = vmatprep.subr.bf16.mxu0 0
      %405 = vmatpush1.bf16.msra.mxu0 0
      %406 = vmatprep.mubr.bf16.mxu0 0
      %407 = vmatmul.mubr.bf16.gmra.mrb[0].mxu0 %v294
      %v408 = vpop.f32.mrb[0].mxu0
      %v409 = vadd.f32 %v228, %v408
      %v410 = vpop.f32.mrb[0].mxu0
      %v411 = vpop.f32.mrb[0].mxu0
      %v412 = vadd.f32 %v228, %v411
      %v413 = vpop.f32.mrb[0].mxu0
      %414 = vmatprep.mubr.bf16.mxu0 0
      %415 = vmatmul.mubr.bf16.gmra.mrb[0].mxu0 %v295
      %v416 = vpop.f32.mrb[0].mxu0
      %v417 = vadd.f32 %v228, %v416
      %v418 = vpop.f32.mrb[0].mxu0
      %v419 = vpop.f32.mrb[0].mxu0
      %v420 = vadd.f32 %v228, %v419
      %v421 = vpop.f32.mrb[0].mxu0
      %422 = vmatprep.mubr.bf16.mxu0 0
      %423 = vmatmul.mubr.bf16.gmra.mrb[0].mxu0 %v296
      %v424 = vpop.f32.mrb[0].mxu0
      %v425 = vadd.f32 %v228, %v424
      %v426 = vpop.f32.mrb[0].mxu0
      %v427 = vpop.f32.mrb[0].mxu0
      %v428 = vadd.f32 %v228, %v427
      %v429 = vpop.f32.mrb[0].mxu0
      %430 = vmatprep.mubr.bf16.mxu0 0
      %431 = vmatmul.mubr.bf16.gmra.mrb[0].mxu0 %v297
      %v432 = vpop.f32.mrb[0].mxu0
      %v433 = vadd.f32 %v228, %v432
      %v434 = vpop.f32.mrb[0].mxu0
      %v435 = vpop.f32.mrb[0].mxu0
      %v436 = vadd.f32 %v228, %v435
      %v437 = vpop.f32.mrb[0].mxu0
      %438 = vmatprep.mubr.bf16.mxu0 0
      %439 = vmatmul.mubr.bf16.gmra.mrb[0].mxu0 %v298
      %v440 = vpop.f32.mrb[0].mxu0
      %v441 = vadd.f32 %v228, %v440
      %v442 = vpop.f32.mrb[0].mxu0
      %v443 = vpop.f32.mrb[0].mxu0
      %v444 = vadd.f32 %v228, %v443
      %v445 = vpop.f32.mrb[0].mxu0
      %446 = vmatprep.mubr.bf16.mxu0 0
      %447 = vmatmul.mubr.bf16.gmra.mrb[0].mxu0 %v299
      %v448 = vpop.f32.mrb[0].mxu0
      %v449 = vadd.f32 %v228, %v448
      %v450 = vpop.f32.mrb[0].mxu0
      %v451 = vpop.f32.mrb[0].mxu0
      %v452 = vadd.f32 %v228, %v451
      %v453 = vpop.f32.mrb[0].mxu0
      %454 = vmatprep.mubr.bf16.mxu0 0
      %455 = vmatmul.mubr.bf16.gmra.mrb[0].mxu0 %v300
      %v456 = vpop.f32.mrb[0].mxu0
      %v457 = vadd.f32 %v228, %v456
      %v458 = vpop.f32.mrb[0].mxu0
      %v459 = vpop.f32.mrb[0].mxu0
      %v460 = vadd.f32 %v228, %v459
      %v461 = vpop.f32.mrb[0].mxu0
      %462 = vmatprep.mubr.bf16.mxu0 0
      %463 = vmatmul.mubr.bf16.gmra.mrb[0].mxu0 %v301
      %v464 = vpop.f32.mrb[0].mxu0
      %v465 = vadd.f32 %v228, %v464
      %v466 = vpop.f32.mrb[0].mxu0
      %v467 = vpop.f32.mrb[0].mxu0
      %v468 = vadd.f32 %v228, %v467
      %v469 = vpop.f32.mrb[0].mxu0
      %470 = vmatprep.mubr.bf16.mxu0 0
      %471 = vmatmul.mubr.bf16.gmra.mrb[0].mxu0 %v302
      %v472 = vpop.f32.mrb[0].mxu0
      %v473 = vadd.f32 %v228, %v472
      %v474 = vpop.f32.mrb[0].mxu0
      %v475 = vpop.f32.mrb[0].mxu0
      %v476 = vadd.f32 %v228, %v475
      %v477 = vpop.f32.mrb[0].mxu0
      %478 = vmatprep.mubr.bf16.mxu0 0
      %479 = vmatmul.mubr.bf16.gmra.mrb[0].mxu0 %v303
      %v480 = vpop.f32.mrb[0].mxu0
      %v481 = vadd.f32 %v228, %v480
      %v482 = vpop.f32.mrb[0].mxu0
      %v483 = vpop.f32.mrb[0].mxu0
      %v484 = vadd.f32 %v228, %v483
      %v485 = vpop.f32.mrb[0].mxu0
      %486 = vmatprep.mubr.bf16.mxu0 0
      %487 = vmatmul.mubr.bf16.gmra.mrb[0].mxu0 %v304
      %v488 = vpop.f32.mrb[0].mxu0
      %v489 = vadd.f32 %v228, %v488
      %v490 = vpop.f32.mrb[0].mxu0
      %v491 = vpop.f32.mrb[0].mxu0
      %v492 = vadd.f32 %v228, %v491
      %v493 = vpop.f32.mrb[0].mxu0
      %494 = vmatprep.mubr.bf16.mxu0 0
      %495 = vmatmul.mubr.bf16.gmra.mrb[0].mxu0 %v305
      %v496 = vpop.f32.mrb[0].mxu0
      %v497 = vadd.f32 %v228, %v496
      %v498 = vpop.f32.mrb[0].mxu0
      %v499 = vpop.f32.mrb[0].mxu0
      %v500 = vadd.f32 %v228, %v499
      %v501 = vpop.f32.mrb[0].mxu0
      %502 = vmatprep.mubr.bf16.mxu0 0
      %503 = vmatmul.mubr.bf16.gmra.mrb[0].mxu0 %v306
      %v504 = vpop.f32.mrb[0].mxu0
      %v505 = vadd.f32 %v228, %v504
      %v506 = vpop.f32.mrb[0].mxu0
      %v507 = vpop.f32.mrb[0].mxu0
      %v508 = vadd.f32 %v228, %v507
      %v509 = vpop.f32.mrb[0].mxu0
      %510 = vmatprep.mubr.bf16.mxu0 0
      %511 = vmatmul.mubr.bf16.gmra.mrb[0].mxu0 %v307
      %v512 = vpop.f32.mrb[0].mxu0
      %v513 = vadd.f32 %v228, %v512
      %v514 = vpop.f32.mrb[0].mxu0
      %v515 = vpop.f32.mrb[0].mxu0
      %v516 = vadd.f32 %v228, %v515
      %v517 = vpop.f32.mrb[0].mxu0
      %518 = vmatprep.mubr.bf16.mxu0 0
      %519 = vmatmul.mubr.bf16.gmra.mrb[0].mxu0 %v308
      %v520 = vpop.f32.mrb[0].mxu0
      %v521 = vadd.f32 %v228, %v520
      %v522 = vpop.f32.mrb[0].mxu0
      %v523 = vpop.f32.mrb[0].mxu0
      %v524 = vadd.f32 %v228, %v523
      %v525 = vpop.f32.mrb[0].mxu0
      %526 = vmatprep.mubr.bf16.mxu0 0
      %527 = vmatmul.mubr.bf16.gmra.mrb[0].mxu0 %v309
      %v528 = vpop.f32.mrb[0].mxu0
      %v529 = vadd.f32 %v228, %v528
      %v530 = vpop.f32.mrb[0].mxu0
      %v531 = vpop.f32.mrb[0].mxu0
      %v532 = vadd.f32 %v228, %v531
      %v533 = vpop.f32.mrb[0].mxu0
      %534 = vdwg.mxu0
      %vm535 = vcmp.ge.f32.partialorder %v409, 0.0
      %vm536 = vcmp.ge.f32.partialorder %v412, 0.0
      %vm537 = vcmp.ge.f32.partialorder %v417, 0.0
      %vm538 = vcmp.ge.f32.partialorder %v420, 0.0
      %vm539 = vcmp.ge.f32.partialorder %v425, 0.0
      %vm540 = vcmp.ge.f32.partialorder %v428, 0.0
      %vm541 = vcmp.ge.f32.partialorder %v433, 0.0
      %vm542 = vcmp.ge.f32.partialorder %v436, 0.0
      %vm543 = vcmp.ge.f32.partialorder %v441, 0.0
      %vm544 = vcmp.ge.f32.partialorder %v444, 0.0
      %vm545 = vcmp.ge.f32.partialorder %v449, 0.0
      %vm546 = vcmp.ge.f32.partialorder %v452, 0.0
      %vm547 = vcmp.ge.f32.partialorder %v457, 0.0
      %vm548 = vcmp.ge.f32.partialorder %v460, 0.0
      %vm549 = vcmp.ge.f32.partialorder %v465, 0.0
      %vm550 = vcmp.ge.f32.partialorder %v468, 0.0
      %vm551 = vcmp.ge.f32.partialorder %v473, 0.0
      %vm552 = vcmp.ge.f32.partialorder %v476, 0.0
      %vm553 = vcmp.ge.f32.partialorder %v481, 0.0
      %vm554 = vcmp.ge.f32.partialorder %v484, 0.0
      %vm555 = vcmp.ge.f32.partialorder %v489, 0.0
      %vm556 = vcmp.ge.f32.partialorder %v492, 0.0
      %vm557 = vcmp.ge.f32.partialorder %v497, 0.0
      %vm558 = vcmp.ge.f32.partialorder %v500, 0.0
      %vm559 = vcmp.ge.f32.partialorder %v505, 0.0
      %vm560 = vcmp.ge.f32.partialorder %v508, 0.0
      %vm561 = vcmp.ge.f32.partialorder %v513, 0.0
      %vm562 = vcmp.ge.f32.partialorder %v516, 0.0
      %vm563 = vcmp.ge.f32.partialorder %v521, 0.0
      %vm564 = vcmp.ge.f32.partialorder %v524, 0.0
      %vm565 = vcmp.ge.f32.partialorder %v529, 0.0
      %vm566 = vcmp.ge.f32.partialorder %v532, 0.0
      %v567 = vmul.f32 %v409, 0.2
      %v568 = vmul.f32 %v412, 0.2
      %v569 = vmul.f32 %v417, 0.2
      %v570 = vmul.f32 %v420, 0.2
      %v571 = vmul.f32 %v425, 0.2
      %v572 = vmul.f32 %v428, 0.2
      %v573 = vmul.f32 %v433, 0.2
      %v574 = vmul.f32 %v436, 0.2
      %v575 = vmul.f32 %v441, 0.2
      %v576 = vmul.f32 %v444, 0.2
      %v577 = vmul.f32 %v449, 0.2
      %v578 = vmul.f32 %v452, 0.2
      %v579 = vmul.f32 %v457, 0.2
      %v580 = vmul.f32 %v460, 0.2
      %v581 = vmul.f32 %v465, 0.2
      %v582 = vmul.f32 %v468, 0.2
      %v583 = vmul.f32 %v473, 0.2
      %v584 = vmul.f32 %v476, 0.2
      %v585 = vmul.f32 %v481, 0.2
      %v586 = vmul.f32 %v484, 0.2
      %v587 = vmul.f32 %v489, 0.2
      %v588 = vmul.f32 %v492, 0.2
      %v589 = vmul.f32 %v497, 0.2
      %v590 = vmul.f32 %v500, 0.2
      %v591 = vmul.f32 %v505, 0.2
      %v592 = vmul.f32 %v508, 0.2
      %v593 = vmul.f32 %v513, 0.2
      %v594 = vmul.f32 %v516, 0.2
      %v595 = vmul.f32 %v521, 0.2
      %v596 = vmul.f32 %v524, 0.2
      %v597 = vmul.f32 %v529, 0.2
      %v598 = vmul.f32 %v532, 0.2
      %v599 = vsel %vm535, %v409, %v567
      %v600 = vsel %vm536, %v412, %v568
      %v601 = vsel %vm537, %v417, %v569
      %v602 = vsel %vm538, %v420, %v570
      %v603 = vsel %vm539, %v425, %v571
      %v604 = vsel %vm540, %v428, %v572
      %v605 = vsel %vm541, %v433, %v573
      %v606 = vsel %vm542, %v436, %v574
      %v607 = vsel %vm543, %v441, %v575
      %v608 = vsel %vm544, %v444, %v576
      %v609 = vsel %vm545, %v449, %v577
      %v610 = vsel %vm546, %v452, %v578
      %v611 = vsel %vm547, %v457, %v579
      %v612 = vsel %vm548, %v460, %v580
      %v613 = vsel %vm549, %v465, %v581
      %v614 = vsel %vm550, %v468, %v582
      %v615 = vsel %vm551, %v473, %v583
      %v616 = vsel %vm552, %v476, %v584
      %v617 = vsel %vm553, %v481, %v585
      %v618 = vsel %vm554, %v484, %v586
      %v619 = vsel %vm555, %v489, %v587
      %v620 = vsel %vm556, %v492, %v588
      %v621 = vsel %vm557, %v497, %v589
      %v622 = vsel %vm558, %v500, %v590
      %v623 = vsel %vm559, %v505, %v591
      %v624 = vsel %vm560, %v508, %v592
      %v625 = vsel %vm561, %v513, %v593
      %v626 = vsel %vm562, %v516, %v594
      %v627 = vsel %vm563, %v521, %v595
      %v628 = vsel %vm564, %v524, %v596
      %v629 = vsel %vm565, %v529, %v597
      %v630 = vsel %vm566, %v532, %v598
      %631 = vst [vmem:[%s172] sm:$0xff] %v599
      %632 = vst [vmem:[%s172 + $0x8] sm:$0xff] %v600
      %633 = vst [vmem:[%s172 + $0x10] sm:$0xff] %v601
      %634 = vst [vmem:[%s172 + $0x18] sm:$0xff] %v602
      %635 = vst [vmem:[%s172 + $0x20] sm:$0xff] %v603
      %636 = vst [vmem:[%s172 + $0x28] sm:$0xff] %v604
      %637 = vst [vmem:[%s172 + $0x30] sm:$0xff] %v605
      %638 = vst [vmem:[%s172 + $0x38] sm:$0xff] %v606
      %639 = vst [vmem:[%s172 + $0x40] sm:$0xff] %v607
      %640 = vst [vmem:[%s172 + $0x48] sm:$0xff] %v608
      %641 = vst [vmem:[%s172 + $0x50] sm:$0xff] %v609
      %642 = vst [vmem:[%s172 + $0x58] sm:$0xff] %v610
      %643 = vst [vmem:[%s172 + $0x60] sm:$0xff] %v611
      %644 = vst [vmem:[%s172 + $0x68] sm:$0xff] %v612
      %645 = vst [vmem:[%s172 + $0x70] sm:$0xff] %v613
      %646 = vst [vmem:[%s172 + $0x78] sm:$0xff] %v614
      %647 = vst [vmem:[%s172 + $0x80] sm:$0xff] %v615
      %648 = vst [vmem:[%s172 + $0x88] sm:$0xff] %v616
      %649 = vst [vmem:[%s172 + $0x90] sm:$0xff] %v617
      %650 = vst [vmem:[%s172 + $0x98] sm:$0xff] %v618
      %651 = vst [vmem:[%s172 + $0xa0] sm:$0xff] %v619
      %652 = vst [vmem:[%s172 + $0xa8] sm:$0xff] %v620
      %653 = vst [vmem:[%s172 + $0xb0] sm:$0xff] %v621
      %654 = vst [vmem:[%s172 + $0xb8] sm:$0xff] %v622
      %655 = vst [vmem:[%s172 + $0xc0] sm:$0xff] %v623
      %656 = vst [vmem:[%s172 + $0xc8] sm:$0xff] %v624
      %657 = vst [vmem:[%s172 + $0xd0] sm:$0xff] %v625
      %658 = vst [vmem:[%s172 + $0xd8] sm:$0xff] %v626
      %659 = vst [vmem:[%s172 + $0xe0] sm:$0xff] %v627
      %660 = vst [vmem:[%s172 + $0xe8] sm:$0xff] %v628
      %661 = vst [vmem:[%s172 + $0xf0] sm:$0xff] %v629
      %662 = vst [vmem:[%s172 + $0xf8] sm:$0xff] %v630
      %s663 = smul.u32 32, %s14
      %p664 = scmp.lt.s32.totalorder %s663, 63
      %s665 = scalar_select %p664, %s663, 63
      %s666 = smul.addr %s665, 8
      %s667 = scalar_lea.vmem %s3, %s666
      // Predicated region
      $region33: #{encoder_forward.4} parent=31 // pred_check
        %p668 = pneg %p100
      $region34: #{encoder_forward.4} parent=31 // pred_check_branch
        %670 = sbr.rel (%p668) target = $region36
      $region35: #{encoder_forward.4} parent=31 // pred_region
        %s671 = smul.u32 32, %s14
      $region36: #{encoder_forward.4} parent=31 // pred_fallthru
        _
    $region32: #{encoder_forward.4} parent=5 // pred_fallthru
      _
    %p672 = scmp.le.s32.totalorder 2, %s9
    // Predicated region
    $region37: #{encoder_forward.4} parent=5 // pred_check
      %p673 = pneg %p672
    $region38: #{encoder_forward.4} parent=5 // pred_check_branch
      %675 = sbr.rel (%p673) target = $region40
    $region39: #{encoder_forward.4} parent=5 // pred_region
      %s676 = ssub.s32 %s9, 2
      // Predicated region
      $region41: #{encoder_forward.4} parent=39 // pred_check
        %p677 = pneg %p106
      $region42: #{encoder_forward.4} parent=39 // pred_check_branch
        %679 = sbr.rel (%p677) target = $region44
      $region43: #{encoder_forward.4} parent=39 // pred_region
        %s680 = smul.u32 32, %s15
        %p681 = scmp.lt.s32.totalorder %s680, 63
        %s682 = scalar_select %p681, %s680, 63
        %s683 = smul.addr %s682, 8
        %s684 = scalar_lea.vmem %s3, %s683
      $region44: #{encoder_forward.4} parent=39 // pred_fallthru
        _
    $region40: #{encoder_forward.4} parent=5 // pred_fallthru
      _
  $region6: #{encoder_forward.4} parent=0 // loop_footer
    %s13 = sadd.s32 1, %s9
  $region7: #{encoder_forward.4} parent=0 // loop_footer_branch
    %8 = sbr.rel target = $region3
  $region8: #{encoder_forward.4} parent=0 // loop_exit
    _

// kernel: encoder_forward.5
$region0: #{encoder_forward.5}
  #allocation0 [shape = 'u32[]', space=smem, size = 0x4, offset = 0x4, fixed_abs, tag = 'smem constant byte address 0x4 - core index']
  #allocation1 [shape = 'u32[144,128]{1,0:T(1,128)}', space=vmem, size = 0x12000, scoped, tag = 'internal scratch']
  %s0 = inlined_call_operand.vmem [shape: bf16[128,128], index: 0, kind: input, shape index: {}]
  %s1 = inlined_call_operand.vmem [shape: bf16[128,128], index: 1, kind: input, shape index: {}]
  %s2 = inlined_call_operand.vmem [shape: f32[1,128], index: 2, kind: input, shape index: {}]
  %s3 = inlined_call_operand.vmem [shape: f32[128,128], index: 3, kind: output, shape index: {}]
  %s4 = sld [smem:[#allocation0]]
  $region45: #{encoder_forward.5} parent=0
    _
  %s6 = ssub.s32 1, %s4
  %s7 = scalar_select 0, %s6, %s4
  loop: start=0, step=1, limit=4
  $region2: #{encoder_forward.5} parent=0 // loop_pre_header
    _
  $region3: #{encoder_forward.5} parent=0 // loop_header
    %s9 = sphi 0, %s13
    %p10 = scmp.ge.s32.totalorder %s9, 4
    %s19 = sphi 0, %s21
    %s22 = sphi 0, %s19
    %s23 = sphi 0, %s22
    %s39 = sphi 0, %s23
    %s43 = sphi 0, %s43
    %s45 = sphi 0, %s43
    %s46 = sphi 0, %s45
    %s60 = sphi 0, %s46
    %s64 = sphi 0, %s64
    %s66 = sphi 0, %s64
    %s67 = sphi 0, %s66
    %s81 = sphi 0, %s67
    %s87 = sphi 0, %s89
    %s90 = sphi 0, %s87
    %s91 = sphi 0, %s90
    %s107 = sphi 0, %s91
  $region4: #{encoder_forward.5} parent=0 // loop_header_branch
    %12 = sbr.rel (%p10) target = $region8
  $region5: #{encoder_forward.5} parent=0 // loop_body
    %s14 = ssub.s32 %s9, 1
    %s15 = ssub.s32 %s9, 2
    %s16 = sadd.s32 %s9, 1
    %s17 = ssub.s32 %s9, %s16
    %p18 = scmp.eq.s32.totalorder %s17, 0
    %s20 = sadd.s32 %s19, 1
    %s21 = scalar_select %p18, %s19, %s20
    %p24 = pneg %p18
    %p25 = scmp.eq.s32.totalorder %s9, 1
    %p26 = por %p24, %p25
    %p27 = scmp.ne.s32.totalorder %s19, %s22
    %p28 = scmp.eq.s32.totalorder %s9, 0
    %p29 = por %p27, %p28
    %p30 = scmp.ne.s32.totalorder %s19, %s22
    %p31 = scmp.eq.s32.totalorder %s14, 1
    %p32 = por %p30, %p31
    %p33 = scmp.ne.s32.totalorder %s22, %s23
    %p34 = scmp.eq.s32.totalorder %s14, 0
    %p35 = por %p33, %p34
    %p36 = scmp.ne.s32.totalorder %s22, %s23
    %p37 = scmp.eq.s32.totalorder %s15, 1
    %p38 = por %p36, %p37
    %p40 = scmp.ne.s32.totalorder %s23, %s39
    %p41 = scmp.eq.s32.totalorder %s15, 0
    %p42 = por %p40, %p41
    %s44 = sadd.s32 %s43, 1
    %p47 = scmp.eq.s32.totalorder %s9, 1
    %p48 = scmp.ne.s32.totalorder %s43, %s45
    %p49 = scmp.eq.s32.totalorder %s9, 0
    %p50 = por %p48, %p49
    %p51 = scmp.ne.s32.totalorder %s43, %s45
    %p52 = scmp.eq.s32.totalorder %s14, 1
    %p53 = por %p51, %p52
    %p54 = scmp.ne.s32.totalorder %s45, %s46
    %p55 = scmp.eq.s32.totalorder %s14, 0
    %p56 = por %p54, %p55
    %p57 = scmp.ne.s32.totalorder %s45, %s46
    %p58 = scmp.eq.s32.totalorder %s15, 1
    %p59 = por %p57, %p58
    %p61 = scmp.ne.s32.totalorder %s46, %s60
    %p62 = scmp.eq.s32.totalorder %s15, 0
    %p63 = por %p61, %p62
    %s65 = sadd.s32 %s64, 1
    %p68 = scmp.eq.s32.totalorder %s9, 1
    %p69 = scmp.ne.s32.totalorder %s64, %s66
    %p70 = scmp.eq.s32.totalorder %s9, 0
    %p71 = por %p69, %p70
    %p72 = scmp.ne.s32.totalorder %s64, %s66
    %p73 = scmp.eq.s32.totalorder %s14, 1
    %p74 = por %p72, %p73
    %p75 = scmp.ne.s32.totalorder %s66, %s67
    %p76 = scmp.eq.s32.totalorder %s14, 0
    %p77 = por %p75, %p76
    %p78 = scmp.ne.s32.totalorder %s66, %s67
    %p79 = scmp.eq.s32.totalorder %s15, 1
    %p80 = por %p78, %p79
    %p82 = scmp.ne.s32.totalorder %s67, %s81
    %p83 = scmp.eq.s32.totalorder %s15, 0
    %p84 = por %p82, %p83
    %s85 = ssub.s32 %s9, %s16
    %p86 = scmp.eq.s32.totalorder %s85, 0
    %s88 = sadd.s32 %s87, 1
    %s89 = scalar_select %p86, %s87, %s88
    %p92 = pneg %p86
    %p93 = scmp.eq.s32.totalorder %s9, 1
    %p94 = por %p92, %p93
    %p95 = scmp.ne.s32.totalorder %s87, %s90
    %p96 = scmp.eq.s32.totalorder %s9, 0
    %p97 = por %p95, %p96
    %p98 = scmp.ne.s32.totalorder %s87, %s90
    %p99 = scmp.eq.s32.totalorder %s14, 1
    %p100 = por %p98, %p99
    %p101 = scmp.ne.s32.totalorder %s90, %s91
    %p102 = scmp.eq.s32.totalorder %s14, 0
    %p103 = por %p101, %p102
    %p104 = scmp.ne.s32.totalorder %s90, %s91
    %p105 = scmp.eq.s32.totalorder %s15, 1
    %p106 = por %p104, %p105
    %p108 = scmp.ne.s32.totalorder %s91, %s107
    %p109 = scmp.eq.s32.totalorder %s15, 0
    %p110 = por %p108, %p109
    %p111 = scmp.le.s32.totalorder 1, %s9
    %p112 = scmp.lt.s32.totalorder %s9, 3
    %p113 = pnand %p111, %p112
    %p114 = pneg %p113
    // Predicated region
    $region9: #{encoder_forward.5} parent=5 // pred_check
      _
    $region10: #{encoder_forward.5} parent=5 // pred_check_branch
      %116 = sbr.rel (%p113) target = $region12
    $region11: #{encoder_forward.5} parent=5 // pred_region
      %s117 = ssub.s32 %s9, 1
      // Predicated region
      $region13: #{encoder_forward.5} parent=11 // pred_check
        %p118 = pneg %p56
      $region14: #{encoder_forward.5} parent=11 // pred_check_branch
        %120 = sbr.rel (%p118) target = $region16
      $region15: #{encoder_forward.5} parent=11 // pred_region
        _
      $region16: #{encoder_forward.5} parent=11 // pred_fallthru
        _
      // Predicated region
      $region17: #{encoder_forward.5} parent=11 // pred_check
        %p121 = pneg %p77
      $region18: #{encoder_forward.5} parent=11 // pred_check_branch
        %123 = sbr.rel (%p121) target = $region20
      $region19: #{encoder_forward.5} parent=11 // pred_region
        _
      $region20: #{encoder_forward.5} parent=11 // pred_fallthru
        _
    $region12: #{encoder_forward.5} parent=5 // pred_fallthru
      _
    %p124 = scmp.lt.s32.totalorder %s9, 2
    // Predicated region
    $region21: #{encoder_forward.5} parent=5 // pred_check
      %p125 = pneg %p124
    $region22: #{encoder_forward.5} parent=5 // pred_check_branch
      %127 = sbr.rel (%p125) target = $region24
    $region23: #{encoder_forward.5} parent=5 // pred_region
      // Predicated region
      $region25: #{encoder_forward.5} parent=23 // pred_check
        %p128 = pneg %p29
      $region26: #{encoder_forward.5} parent=23 // pred_check_branch
        %130 = sbr.rel (%p128) target = $region28
      $region27: #{encoder_forward.5} parent=23 // pred_region
        %s131 = smul.u32 8, %s9
        %p132 = scmp.lt.s32.totalorder %s131, 15
        %s133 = scalar_select %p132, %s131, 15
        %s134 = smul.addr %s133, 4
        %s135 = scalar_lea.vmem %s0, %s134
        %s136 = smul.u32 8, %s9
      $region28: #{encoder_forward.5} parent=23 // pred_fallthru
        _
    $region24: #{encoder_forward.5} parent=5 // pred_fallthru
      _
    %p137 = scmp.le.s32.totalorder 1, %s9
    %p138 = scmp.lt.s32.totalorder %s9, 3
    %p139 = pnand %p137, %p138
    %p140 = pneg %p139
    // Predicated region
    $region29: #{encoder_forward.5} parent=5 // pred_check
      _
    $region30: #{encoder_forward.5} parent=5 // pred_check_branch
      %142 = sbr.rel (%p139) target = $region32
    $region31: #{encoder_forward.5} parent=5 // pred_region
      %s143 = ssub.s32 %s9, 1
      %s144 = smul.u32 8, %s14
      %p145 = scmp.lt.s32.totalorder %s144, 15
      %s146 = scalar_select %p145, %s144, 15
      %s147 = smul.addr %s146, 4
      %s148 = scalar_lea.vmem %s0, %s147
      %p149 = pneg %p35
      %p150 = pneg %p32
      %p151 = pneg %p56
      %p152 = pneg %p53
      %p153 = pneg %p77
      %p154 = pneg %p74
      %p155 = pneg %p103
      %p156 = pneg %p100
      %s157 = smul.u32 8, %s14
      %p158 = scmp.lt.s32.totalorder %s157, 15
      %s159 = scalar_select %p158, %s157, 15
      %s160 = smul.addr %s159, 8
      %s161 = scalar_lea.vmem %s3, %s160
      %s162 = smul.u32 8, %s14
      %p163 = scmp.lt.s32.totalorder %s162, 15
      %s164 = scalar_select %p163, %s162, 15
      %s165 = smul.addr %s164, 4
      %s166 = scalar_lea.vmem %s0, %s165
      %s167 = smul.u32 8, %s14
      %s168 = smul.u32 8, %s14
      %p169 = scmp.lt.s32.totalorder %s168, 15
      %s170 = scalar_select %p169, %s168, 15
      %s171 = smul.addr %s170, 8
      %s172 = scalar_lea.vmem %s3, %s171
      %s173 = smul.u32 8, %s14
      %v175 = vld [vmem:[%s166] sm:$0xf]
      %v176 = vld [vmem:[%s166 + $0x4] sm:$0xf]
      %v177 = vld [vmem:[%s166 + $0x8] sm:$0xf]
      %v178 = vld [vmem:[%s166 + $0xc] sm:$0xf]
      %v179 = vld [vmem:[%s166 + $0x10] sm:$0xf]
      %v180 = vld [vmem:[%s166 + $0x14] sm:$0xf]
      %v181 = vld [vmem:[%s166 + $0x18] sm:$0xf]
      %v182 = vld [vmem:[%s166 + $0x1c] sm:$0xf]
      %v183 = vld [vmem:[%s1] sm:$0xf]
      %v184 = vld [vmem:[%s1 + $0x4] sm:$0xf]
      %v185 = vld [vmem:[%s1 + $0x8] sm:$0xf]
      %v186 = vld [vmem:[%s1 + $0xc] sm:$0xf]
      %v187 = vld [vmem:[%s1 + $0x10] sm:$0xf]
      %v188 = vld [vmem:[%s1 + $0x14] sm:$0xf]
      %v189 = vld [vmem:[%s1 + $0x18] sm:$0xf]
      %v190 = vld [vmem:[%s1 + $0x1c] sm:$0xf]
      %v191 = vld [vmem:[%s1 + $0x20] sm:$0xf]
      %v192 = vld [vmem:[%s1 + $0x24] sm:$0xf]
      %v193 = vld [vmem:[%s1 + $0x28] sm:$0xf]
      %v194 = vld [vmem:[%s1 + $0x2c] sm:$0xf]
      %v195 = vld [vmem:[%s1 + $0x30] sm:$0xf]
      %v196 = vld [vmem:[%s1 + $0x34] sm:$0xf]
      %v197 = vld [vmem:[%s1 + $0x38] sm:$0xf]
      %v198 = vld [vmem:[%s1 + $0x3c] sm:$0xf]
      %v199 = vld [vmem:[%s2] sm:$0x1]
      %v201 = vlaneseq
      %v202 = vshrl.u32 %v201, 7
      %v203 = vsub.s32 0, %v202
      %v204 = vrot.slane %v199, %v203
      %v214 = vunpack.c.l.b16 %v175
      %v215 = vunpack.c.l.b16 %v176
      %v216 = vunpack.c.l.b16 %v177
      %v217 = vunpack.c.l.b16 %v178
      %v218 = vunpack.c.l.b16 %v179
      %v219 = vunpack.c.l.b16 %v180
      %v220 = vunpack.c.l.b16 %v181
      %v221 = vunpack.c.l.b16 %v182
      %v222 = vpack.c.b16 %v215, %v214
      %v223 = vpack.c.b16 %v217, %v216
      %v224 = vpack.c.b16 %v219, %v218
      %v225 = vpack.c.b16 %v221, %v220
      %v246 = vunpack.c.l.b16 %v183
      %v247 = vunpack.c.l.b16 %v184
      %v248 = vunpack.c.l.b16 %v185
      %v249 = vunpack.c.l.b16 %v186
      %v250 = vunpack.c.l.b16 %v187
      %v251 = vunpack.c.l.b16 %v188
      %v252 = vunpack.c.l.b16 %v189
      %v253 = vunpack.c.l.b16 %v190
      %v254 = vunpack.c.l.b16 %v191
      %v255 = vunpack.c.l.b16 %v192
      %v256 = vunpack.c.l.b16 %v193
      %v257 = vunpack.c.l.b16 %v194
      %v258 = vunpack.c.l.b16 %v195
      %v259 = vunpack.c.l.b16 %v196
      %v260 = vunpack.c.l.b16 %v197
      %v261 = vunpack.c.l.b16 %v198
      %v262 = vpack.c.b16 %v247, %v246
      %v263 = vpack.c.b16 %v249, %v248
      %v264 = vpack.c.b16 %v251, %v250
      %v265 = vpack.c.b16 %v253, %v252
      %v266 = vpack.c.b16 %v255, %v254
      %v267 = vpack.c.b16 %v257, %v256
      %v268 = vpack.c.b16 %v259, %v258
      %v269 = vpack.c.b16 %v261, %v260
      %278 = vmatprep.subr.bf16.mxu0 0
      %279 = vmatpush1.bf16.msra.mxu0 %v262
      %280 = vmatprep.subr.bf16.mxu0 0
      %281 = vmatpush1.bf16.msra.mxu0 %v263
      %282 = vmatprep.subr.bf16.mxu0 0
      %283 = vmatpush1.bf16.msra.mxu0 %v264
      %284 = vmatprep.subr.bf16.mxu0 0
      %285 = vmatpush1.bf16.msra.mxu0 %v265
      %286 = vmatprep.subr.bf16.mxu0 0
      %287 = vmatpush1.bf16.msra.mxu0 %v266
      %288 = vmatprep.subr.bf16.mxu0 0
      %289 = vmatpush1.bf16.msra.mxu0 %v267
      %290 = vmatprep.subr.bf16.mxu0 0
      %291 = vmatpush1.bf16.msra.mxu0 %v268
      %292 = vmatprep.subr.bf16.mxu0 0
      %293 = vmatpush1.bf16.msra.mxu0 %v269
      %294 = vmatprep.subr.bf16.mxu0 0
      %295 = vmatpush1.bf16.msra.mxu0 0
      %296 = vmatprep.subr.bf16.mxu0 0
      %297 = vmatpush1.bf16.msra.mxu0 0
      %298 = vmatprep.subr.bf16.mxu0 0
      %299 = vmatpush1.bf16.msra.mxu0 0
      %300 = vmatprep.subr.bf16.mxu0 0
      %301 = vmatpush1.bf16.msra.mxu0 0
      %302 = vmatprep.subr.bf16.mxu0 0
      %303 = vmatpush1.bf16.msra.mxu0 0
      %304 = vmatprep.subr.bf16.mxu0 0
      %305 = vmatpush1.bf16.msra.mxu0 0
      %306 = vmatprep.subr.bf16.mxu0 0
      %307 = vmatpush1.bf16.msra.mxu0 0
      %308 = vmatprep.subr.bf16.mxu0 0
      %309 = vmatpush1.bf16.msra.mxu0 0
      %310 = vmatprep.mubr.bf16.mxu0 0
      %311 = vmatmul.mubr.bf16.gmra.mrb[0].mxu0 %v222
      %v312 = vpop.f32.mrb[0].mxu0
      %v313 = vadd.f32 %v204, %v312
      %v314 = vpop.f32.mrb[0].mxu0
      %v315 = vpop.f32.mrb[0].mxu0
      %v316 = vadd.f32 %v204, %v315
      %v317 = vpop.f32.mrb[0].mxu0
      %318 = vmatprep.mubr.bf16.mxu0 0
      %319 = vmatmul.mubr.bf16.gmra.mrb[0].mxu0 %v223
      %v320 = vpop.f32.mrb[0].mxu0
      %v321 = vadd.f32 %v204, %v320
      %v322 = vpop.f32.mrb[0].mxu0
      %v323 = vpop.f32.mrb[0].mxu0
      %v324 = vadd.f32 %v204, %v323
      %v325 = vpop.f32.mrb[0].mxu0
      %326 = vmatprep.mubr.bf16.mxu0 0
      %327 = vmatmul.mubr.bf16.gmra.mrb[0].mxu0 %v224
      %v328 = vpop.f32.mrb[0].mxu0
      %v329 = vadd.f32 %v204, %v328
      %v330 = vpop.f32.mrb[0].mxu0
      %v331 = vpop.f32.mrb[0].mxu0
      %v332 = vadd.f32 %v204, %v331
      %v333 = vpop.f32.mrb[0].mxu0
      %334 = vmatprep.mubr.bf16.mxu0 0
      %335 = vmatmul.mubr.bf16.gmra.mrb[0].mxu0 %v225
      %v336 = vpop.f32.mrb[0].mxu0
      %v337 = vadd.f32 %v204, %v336
      %v338 = vpop.f32.mrb[0].mxu0
      %v339 = vpop.f32.mrb[0].mxu0
      %v340 = vadd.f32 %v204, %v339
      %v341 = vpop.f32.mrb[0].mxu0
      %342 = vdwg.mxu0
      %vm343 = vcmp.ge.f32.partialorder %v313, 0.0
      %vm344 = vcmp.ge.f32.partialorder %v316, 0.0
      %vm345 = vcmp.ge.f32.partialorder %v321, 0.0
      %vm346 = vcmp.ge.f32.partialorder %v324, 0.0
      %vm347 = vcmp.ge.f32.partialorder %v329, 0.0
      %vm348 = vcmp.ge.f32.partialorder %v332, 0.0
      %vm349 = vcmp.ge.f32.partialorder %v337, 0.0
      %vm350 = vcmp.ge.f32.partialorder %v340, 0.0
      %v351 = vmul.f32 %v313, 0.2
      %v352 = vmul.f32 %v316, 0.2
      %v353 = vmul.f32 %v321, 0.2
      %v354 = vmul.f32 %v324, 0.2
      %v355 = vmul.f32 %v329, 0.2
      %v356 = vmul.f32 %v332, 0.2
      %v357 = vmul.f32 %v337, 0.2
      %v358 = vmul.f32 %v340, 0.2
      %v359 = vsel %vm343, %v313, %v351
      %v360 = vsel %vm344, %v316, %v352
      %v361 = vsel %vm345, %v321, %v353
      %v362 = vsel %vm346, %v324, %v354
      %v363 = vsel %vm347, %v329, %v355
      %v364 = vsel %vm348, %v332, %v356
      %v365 = vsel %vm349, %v337, %v357
      %v366 = vsel %vm350, %v340, %v358
      %367 = vst [vmem:[%s172] sm:$0xff] %v359
      %368 = vst [vmem:[%s172 + $0x8] sm:$0xff] %v360
      %369 = vst [vmem:[%s172 + $0x10] sm:$0xff] %v361
      %370 = vst [vmem:[%s172 + $0x18] sm:$0xff] %v362
      %371 = vst [vmem:[%s172 + $0x20] sm:$0xff] %v363
      %372 = vst [vmem:[%s172 + $0x28] sm:$0xff] %v364
      %373 = vst [vmem:[%s172 + $0x30] sm:$0xff] %v365
      %374 = vst [vmem:[%s172 + $0x38] sm:$0xff] %v366
      %s375 = smul.u32 8, %s14
      %p376 = scmp.lt.s32.totalorder %s375, 15
      %s377 = scalar_select %p376, %s375, 15
      %s378 = smul.addr %s377, 8
      %s379 = scalar_lea.vmem %s3, %s378
      // Predicated region
      $region33: #{encoder_forward.5} parent=31 // pred_check
        %p380 = pneg %p100
      $region34: #{encoder_forward.5} parent=31 // pred_check_branch
        %382 = sbr.rel (%p380) target = $region36
      $region35: #{encoder_forward.5} parent=31 // pred_region
        %s383 = smul.u32 8, %s14
      $region36: #{encoder_forward.5} parent=31 // pred_fallthru
        _
    $region32: #{encoder_forward.5} parent=5 // pred_fallthru
      _
    %p384 = scmp.le.s32.totalorder 2, %s9
    // Predicated region
    $region37: #{encoder_forward.5} parent=5 // pred_check
      %p385 = pneg %p384
    $region38: #{encoder_forward.5} parent=5 // pred_check_branch
      %387 = sbr.rel (%p385) target = $region40
    $region39: #{encoder_forward.5} parent=5 // pred_region
      %s388 = ssub.s32 %s9, 2
      // Predicated region
      $region41: #{encoder_forward.5} parent=39 // pred_check
        %p389 = pneg %p106
      $region42: #{encoder_forward.5} parent=39 // pred_check_branch
        %391 = sbr.rel (%p389) target = $region44
      $region43: #{encoder_forward.5} parent=39 // pred_region
        %s392 = smul.u32 8, %s15
        %p393 = scmp.lt.s32.totalorder %s392, 15
        %s394 = scalar_select %p393, %s392, 15
        %s395 = smul.addr %s394, 8
        %s396 = scalar_lea.vmem %s3, %s395
      $region44: #{encoder_forward.5} parent=39 // pred_fallthru
        _
    $region40: #{encoder_forward.5} parent=5 // pred_fallthru
      _
  $region6: #{encoder_forward.5} parent=0 // loop_footer
    %s13 = sadd.s32 1, %s9
  $region7: #{encoder_forward.5} parent=0 // loop_footer_branch
    %8 = sbr.rel target = $region3
  $region8: #{encoder_forward.5} parent=0 // loop_exit
    _

// kernel: encoder_forward.6
$region0: #{encoder_forward.6}
  #allocation0 [shape = 'u32[]', space=smem, size = 0x4, offset = 0x4, fixed_abs, tag = 'smem constant byte address 0x4 - core index']
  #allocation1 [shape = 'u32[144,128]{1,0:T(1,128)}', space=vmem, size = 0x12000, scoped, tag = 'internal scratch']
  %s0 = inlined_call_operand.vmem [shape: bf16[32,256], index: 0, kind: input, shape index: {}]
  %s1 = inlined_call_operand.vmem [shape: bf16[256,128], index: 1, kind: input, shape index: {}]
  %s2 = inlined_call_operand.vmem [shape: f32[1,128], index: 2, kind: input, shape index: {}]
  %s3 = inlined_call_operand.vmem [shape: f32[32,128], index: 3, kind: output, shape index: {}]
  %s4 = sld [smem:[#allocation0]]
  $region45: #{encoder_forward.6} parent=0
    _
  %s6 = ssub.s32 1, %s4
  %s7 = scalar_select 0, %s6, %s4
  loop: start=0, step=1, limit=4
  $region2: #{encoder_forward.6} parent=0 // loop_pre_header
    _
  $region3: #{encoder_forward.6} parent=0 // loop_header
    %s9 = sphi 0, %s13
    %p10 = scmp.ge.s32.totalorder %s9, 4
    %s19 = sphi 0, %s21
    %s22 = sphi 0, %s19
    %s23 = sphi 0, %s22
    %s39 = sphi 0, %s23
    %s43 = sphi 0, %s43
    %s45 = sphi 0, %s43
    %s46 = sphi 0, %s45
    %s60 = sphi 0, %s46
    %s64 = sphi 0, %s64
    %s66 = sphi 0, %s64
    %s67 = sphi 0, %s66
    %s81 = sphi 0, %s67
    %s87 = sphi 0, %s89
    %s90 = sphi 0, %s87
    %s91 = sphi 0, %s90
    %s107 = sphi 0, %s91
  $region4: #{encoder_forward.6} parent=0 // loop_header_branch
    %12 = sbr.rel (%p10) target = $region8
  $region5: #{encoder_forward.6} parent=0 // loop_body
    %s14 = ssub.s32 %s9, 1
    %s15 = ssub.s32 %s9, 2
    %s16 = sadd.s32 %s9, 1
    %s17 = ssub.s32 %s9, %s16
    %p18 = scmp.eq.s32.totalorder %s17, 0
    %s20 = sadd.s32 %s19, 1
    %s21 = scalar_select %p18, %s19, %s20
    %p24 = pneg %p18
    %p25 = scmp.eq.s32.totalorder %s9, 1
    %p26 = por %p24, %p25
    %p27 = scmp.ne.s32.totalorder %s19, %s22
    %p28 = scmp.eq.s32.totalorder %s9, 0
    %p29 = por %p27, %p28
    %p30 = scmp.ne.s32.totalorder %s19, %s22
    %p31 = scmp.eq.s32.totalorder %s14, 1
    %p32 = por %p30, %p31
    %p33 = scmp.ne.s32.totalorder %s22, %s23
    %p34 = scmp.eq.s32.totalorder %s14, 0
    %p35 = por %p33, %p34
    %p36 = scmp.ne.s32.totalorder %s22, %s23
    %p37 = scmp.eq.s32.totalorder %s15, 1
    %p38 = por %p36, %p37
    %p40 = scmp.ne.s32.totalorder %s23, %s39
    %p41 = scmp.eq.s32.totalorder %s15, 0
    %p42 = por %p40, %p41
    %s44 = sadd.s32 %s43, 1
    %p47 = scmp.eq.s32.totalorder %s9, 1
    %p48 = scmp.ne.s32.totalorder %s43, %s45
    %p49 = scmp.eq.s32.totalorder %s9, 0
    %p50 = por %p48, %p49
    %p51 = scmp.ne.s32.totalorder %s43, %s45
    %p52 = scmp.eq.s32.totalorder %s14, 1
    %p53 = por %p51, %p52
    %p54 = scmp.ne.s32.totalorder %s45, %s46
    %p55 = scmp.eq.s32.totalorder %s14, 0
    %p56 = por %p54, %p55
    %p57 = scmp.ne.s32.totalorder %s45, %s46
    %p58 = scmp.eq.s32.totalorder %s15, 1
    %p59 = por %p57, %p58
    %p61 = scmp.ne.s32.totalorder %s46, %s60
    %p62 = scmp.eq.s32.totalorder %s15, 0
    %p63 = por %p61, %p62
    %s65 = sadd.s32 %s64, 1
    %p68 = scmp.eq.s32.totalorder %s9, 1
    %p69 = scmp.ne.s32.totalorder %s64, %s66
    %p70 = scmp.eq.s32.totalorder %s9, 0
    %p71 = por %p69, %p70
    %p72 = scmp.ne.s32.totalorder %s64, %s66
    %p73 = scmp.eq.s32.totalorder %s14, 1
    %p74 = por %p72, %p73
    %p75 = scmp.ne.s32.totalorder %s66, %s67
    %p76 = scmp.eq.s32.totalorder %s14, 0
    %p77 = por %p75, %p76
    %p78 = scmp.ne.s32.totalorder %s66, %s67
    %p79 = scmp.eq.s32.totalorder %s15, 1
    %p80 = por %p78, %p79
    %p82 = scmp.ne.s32.totalorder %s67, %s81
    %p83 = scmp.eq.s32.totalorder %s15, 0
    %p84 = por %p82, %p83
    %s85 = ssub.s32 %s9, %s16
    %p86 = scmp.eq.s32.totalorder %s85, 0
    %s88 = sadd.s32 %s87, 1
    %s89 = scalar_select %p86, %s87, %s88
    %p92 = pneg %p86
    %p93 = scmp.eq.s32.totalorder %s9, 1
    %p94 = por %p92, %p93
    %p95 = scmp.ne.s32.totalorder %s87, %s90
    %p96 = scmp.eq.s32.totalorder %s9, 0
    %p97 = por %p95, %p96
    %p98 = scmp.ne.s32.totalorder %s87, %s90
    %p99 = scmp.eq.s32.totalorder %s14, 1
    %p100 = por %p98, %p99
    %p101 = scmp.ne.s32.totalorder %s90, %s91
    %p102 = scmp.eq.s32.totalorder %s14, 0
    %p103 = por %p101, %p102
    %p104 = scmp.ne.s32.totalorder %s90, %s91
    %p105 = scmp.eq.s32.totalorder %s15, 1
    %p106 = por %p104, %p105
    %p108 = scmp.ne.s32.totalorder %s91, %s107
    %p109 = scmp.eq.s32.totalorder %s15, 0
    %p110 = por %p108, %p109
    %p111 = scmp.le.s32.totalorder 1, %s9
    %p112 = scmp.lt.s32.totalorder %s9, 3
    %p113 = pnand %p111, %p112
    %p114 = pneg %p113
    // Predicated region
    $region9: #{encoder_forward.6} parent=5 // pred_check
      _
    $region10: #{encoder_forward.6} parent=5 // pred_check_branch
      %116 = sbr.rel (%p113) target = $region12
    $region11: #{encoder_forward.6} parent=5 // pred_region
      %s117 = ssub.s32 %s9, 1
      // Predicated region
      $region13: #{encoder_forward.6} parent=11 // pred_check
        %p118 = pneg %p56
      $region14: #{encoder_forward.6} parent=11 // pred_check_branch
        %120 = sbr.rel (%p118) target = $region16
      $region15: #{encoder_forward.6} parent=11 // pred_region
        _
      $region16: #{encoder_forward.6} parent=11 // pred_fallthru
        _
      // Predicated region
      $region17: #{encoder_forward.6} parent=11 // pred_check
        %p121 = pneg %p77
      $region18: #{encoder_forward.6} parent=11 // pred_check_branch
        %123 = sbr.rel (%p121) target = $region20
      $region19: #{encoder_forward.6} parent=11 // pred_region
        _
      $region20: #{encoder_forward.6} parent=11 // pred_fallthru
        _
    $region12: #{encoder_forward.6} parent=5 // pred_fallthru
      _
    %p124 = scmp.lt.s32.totalorder %s9, 2
    // Predicated region
    $region21: #{encoder_forward.6} parent=5 // pred_check
      %p125 = pneg %p124
    $region22: #{encoder_forward.6} parent=5 // pred_check_branch
      %127 = sbr.rel (%p125) target = $region24
    $region23: #{encoder_forward.6} parent=5 // pred_region
      // Predicated region
      $region25: #{encoder_forward.6} parent=23 // pred_check
        %p128 = pneg %p29
      $region26: #{encoder_forward.6} parent=23 // pred_check_branch
        %130 = sbr.rel (%p128) target = $region28
      $region27: #{encoder_forward.6} parent=23 // pred_region
        %s131 = smul.u32 2, %s9
        %p132 = scmp.lt.s32.totalorder %s131, 3
        %s133 = scalar_select %p132, %s131, 3
        %s134 = smul.addr %s133, 2
        %s135 = smul.addr %s134, 4
        %s136 = scalar_lea.vmem %s0, %s135
        %s137 = smul.u32 2, %s9
      $region28: #{encoder_forward.6} parent=23 // pred_fallthru
        _
    $region24: #{encoder_forward.6} parent=5 // pred_fallthru
      _
    %p138 = scmp.le.s32.totalorder 1, %s9
    %p139 = scmp.lt.s32.totalorder %s9, 3
    %p140 = pnand %p138, %p139
    %p141 = pneg %p140
    // Predicated region
    $region29: #{encoder_forward.6} parent=5 // pred_check
      _
    $region30: #{encoder_forward.6} parent=5 // pred_check_branch
      %143 = sbr.rel (%p140) target = $region32
    $region31: #{encoder_forward.6} parent=5 // pred_region
      %s144 = ssub.s32 %s9, 1
      %s145 = smul.u32 2, %s14
      %p146 = scmp.lt.s32.totalorder %s145, 3
      %s147 = scalar_select %p146, %s145, 3
      %s148 = smul.addr %s147, 2
      %s149 = smul.addr %s148, 4
      %s150 = scalar_lea.vmem %s0, %s149
      %p151 = pneg %p35
      %p152 = pneg %p32
      %p153 = pneg %p56
      %p154 = pneg %p53
      %p155 = pneg %p77
      %p156 = pneg %p74
      %p157 = pneg %p103
      %p158 = pneg %p100
      %s159 = smul.u32 2, %s14
      %p160 = scmp.lt.s32.totalorder %s159, 3
      %s161 = scalar_select %p160, %s159, 3
      %s162 = smul.addr %s161, 8
      %s163 = scalar_lea.vmem %s3, %s162
      %s164 = smul.u32 2, %s14
      %p165 = scmp.lt.s32.totalorder %s164, 3
      %s166 = scalar_select %p165, %s164, 3
      %s167 = smul.addr %s166, 2
      %s168 = smul.addr %s167, 4
      %s169 = scalar_lea.vmem %s0, %s168
      %s170 = smul.u32 2, %s14
      %s171 = smul.u32 2, %s14
      %p172 = scmp.lt.s32.totalorder %s171, 3
      %s173 = scalar_select %p172, %s171, 3
      %s174 = smul.addr %s173, 8
      %s175 = scalar_lea.vmem %s3, %s174
      %s176 = smul.u32 2, %s14
      %v178 = vld [vmem:[%s169] sm:$0xff]
      %v179 = vld [vmem:[%s169 + $0x8] sm:$0xff]
      %v180 = vld [vmem:[%s1] sm:$0xf]
      %v181 = vld [vmem:[%s1 + $0x4] sm:$0xf]
      %v182 = vld [vmem:[%s1 + $0x8] sm:$0xf]
      %v183 = vld [vmem:[%s1 + $0xc] sm:$0xf]
      %v184 = vld [vmem:[%s1 + $0x10] sm:$0xf]
      %v185 = vld [vmem:[%s1 + $0x14] sm:$0xf]
      %v186 = vld [vmem:[%s1 + $0x18] sm:$0xf]
      %v187 = vld [vmem:[%s1 + $0x1c] sm:$0xf]
      %v188 = vld [vmem:[%s1 + $0x20] sm:$0xf]
      %v189 = vld [vmem:[%s1 + $0x24] sm:$0xf]
      %v190 = vld [vmem:[%s1 + $0x28] sm:$0xf]
      %v191 = vld [vmem:[%s1 + $0x2c] sm:$0xf]
      %v192 = vld [vmem:[%s1 + $0x30] sm:$0xf]
      %v193 = vld [vmem:[%s1 + $0x34] sm:$0xf]
      %v194 = vld [vmem:[%s1 + $0x38] sm:$0xf]
      %v195 = vld [vmem:[%s1 + $0x3c] sm:$0xf]
      %v196 = vld [vmem:[%s1 + $0x40] sm:$0xf]
      %v197 = vld [vmem:[%s1 + $0x44] sm:$0xf]
      %v198 = vld [vmem:[%s1 + $0x48] sm:$0xf]
      %v199 = vld [vmem:[%s1 + $0x4c] sm:$0xf]
      %v200 = vld [vmem:[%s1 + $0x50] sm:$0xf]
      %v201 = vld [vmem:[%s1 + $0x54] sm:$0xf]
      %v202 = vld [vmem:[%s1 + $0x58] sm:$0xf]
      %v203 = vld [vmem:[%s1 + $0x5c] sm:$0xf]
      %v204 = vld [vmem:[%s1 + $0x60] sm:$0xf]
      %v205 = vld [vmem:[%s1 + $0x64] sm:$0xf]
      %v206 = vld [vmem:[%s1 + $0x68] sm:$0xf]
      %v207 = vld [vmem:[%s1 + $0x6c] sm:$0xf]
      %v208 = vld [vmem:[%s1 + $0x70] sm:$0xf]
      %v209 = vld [vmem:[%s1 + $0x74] sm:$0xf]
      %v210 = vld [vmem:[%s1 + $0x78] sm:$0xf]
      %v211 = vld [vmem:[%s1 + $0x7c] sm:$0xf]
      %v212 = vld [vmem:[%s2] sm:$0x1]
      %v214 = vlaneseq
      %v215 = vshrl.u32 %v214, 7
      %v216 = vsub.s32 0, %v215
      %v217 = vrot.slane %v212, %v216
      %v221 = vunpack.c.l.b16 %v178
      %v222 = vunpack.c.h.b16 %v178
      %v223 = vunpack.c.l.b16 %v179
      %v224 = vunpack.c.h.b16 %v179
      %v225 = vpack.c.b16 %v223, %v221
      %v226 = vpack.c.b16 %v224, %v222
      %v261 = vunpack.c.l.b16 %v180
      %v262 = vunpack.c.l.b16 %v181
      %v263 = vunpack.c.l.b16 %v182
      %v264 = vunpack.c.l.b16 %v183
      %v265 = vunpack.c.l.b16 %v184
      %v266 = vunpack.c.l.b16 %v185
      %v267 = vunpack.c.l.b16 %v186
      %v268 = vunpack.c.l.b16 %v187
      %v269 = vunpack.c.l.b16 %v188
      %v270 = vunpack.c.l.b16 %v189
      %v271 = vunpack.c.l.b16 %v190
      %v272 = vunpack.c.l.b16 %v191
      %v273 = vunpack.c.l.b16 %v192
      %v274 = vunpack.c.l.b16 %v193
      %v275 = vunpack.c.l.b16 %v194
      %v276 = vunpack.c.l.b16 %v195
      %v277 = vunpack.c.l.b16 %v196
      %v278 = vunpack.c.l.b16 %v197
      %v279 = vunpack.c.l.b16 %v198
      %v280 = vunpack.c.l.b16 %v199
      %v281 = vunpack.c.l.b16 %v200
      %v282 = vunpack.c.l.b16 %v201
      %v283 = vunpack.c.l.b16 %v202
      %v284 = vunpack.c.l.b16 %v203
      %v285 = vunpack.c.l.b16 %v204
      %v286 = vunpack.c.l.b16 %v205
      %v287 = vunpack.c.l.b16 %v206
      %v288 = vunpack.c.l.b16 %v207
      %v289 = vunpack.c.l.b16 %v208
      %v290 = vunpack.c.l.b16 %v209
      %v291 = vunpack.c.l.b16 %v210
      %v292 = vunpack.c.l.b16 %v211
      %v293 = vpack.c.b16 %v262, %v261
      %v294 = vpack.c.b16 %v264, %v263
      %v295 = vpack.c.b16 %v266, %v265
      %v296 = vpack.c.b16 %v268, %v267
      %v297 = vpack.c.b16 %v270, %v269
      %v298 = vpack.c.b16 %v272, %v271
      %v299 = vpack.c.b16 %v274, %v273
      %v300 = vpack.c.b16 %v276, %v275
      %v301 = vpack.c.b16 %v278, %v277
      %v302 = vpack.c.b16 %v280, %v279
      %v303 = vpack.c.b16 %v282, %v281
      %v304 = vpack.c.b16 %v284, %v283
      %v305 = vpack.c.b16 %v286, %v285
      %v306 = vpack.c.b16 %v288, %v287
      %v307 = vpack.c.b16 %v290, %v289
      %v308 = vpack.c.b16 %v292, %v291
      %325 = vmatprep.subr.bf16.mxu0 0
      %326 = vmatpush1.bf16.msra.mxu0 %v293
      %327 = vmatprep.subr.bf16.mxu0 0
      %328 = vmatpush1.bf16.msra.mxu0 %v294
      %329 = vmatprep.subr.bf16.mxu0 0
      %330 = vmatpush1.bf16.msra.mxu0 %v295
      %331 = vmatprep.subr.bf16.mxu0 0
      %332 = vmatpush1.bf16.msra.mxu0 %v296
      %333 = vmatprep.subr.bf16.mxu0 0
      %334 = vmatpush1.bf16.msra.mxu0 %v297
      %335 = vmatprep.subr.bf16.mxu0 0
      %336 = vmatpush1.bf16.msra.mxu0 %v298
      %337 = vmatprep.subr.bf16.mxu0 0
      %338 = vmatpush1.bf16.msra.mxu0 %v299
      %339 = vmatprep.subr.bf16.mxu0 0
      %340 = vmatpush1.bf16.msra.mxu0 %v300
      %341 = vmatprep.subr.bf16.mxu0 0
      %342 = vmatpush1.bf16.msra.mxu0 %v301
      %343 = vmatprep.subr.bf16.mxu0 0
      %344 = vmatpush1.bf16.msra.mxu0 %v302
      %345 = vmatprep.subr.bf16.mxu0 0
      %346 = vmatpush1.bf16.msra.mxu0 %v303
      %347 = vmatprep.subr.bf16.mxu0 0
      %348 = vmatpush1.bf16.msra.mxu0 %v304
      %349 = vmatprep.subr.bf16.mxu0 0
      %350 = vmatpush1.bf16.msra.mxu0 %v305
      %351 = vmatprep.subr.bf16.mxu0 0
      %352 = vmatpush1.bf16.msra.mxu0 %v306
      %353 = vmatprep.subr.bf16.mxu0 0
      %354 = vmatpush1.bf16.msra.mxu0 %v307
      %355 = vmatprep.subr.bf16.mxu0 0
      %356 = vmatpush1.bf16.msra.mxu0 %v308
      %357 = vmatprep.mubr.bf16.mxu0 %v226
      %358 = vmatmul.mubr.bf16.gmra.mrb[0].mxu0 %v225
      %v359 = vpop.f32.mrb[0].mxu0
      %v360 = vadd.f32 %v217, %v359
      %v361 = vpop.f32.mrb[0].mxu0
      %v362 = vpop.f32.mrb[0].mxu0
      %v363 = vadd.f32 %v217, %v362
      %v364 = vpop.f32.mrb[0].mxu0
      %365 = vdwg.mxu0
      %vm366 = vcmp.ge.f32.partialorder %v360, 0.0
      %vm367 = vcmp.ge.f32.partialorder %v363, 0.0
      %v368 = vmul.f32 %v360, 0.2
      %v369 = vmul.f32 %v363, 0.2
      %v370 = vsel %vm366, %v360, %v368
      %v371 = vsel %vm367, %v363, %v369
      %372 = vst [vmem:[%s175] sm:$0xff] %v370
      %373 = vst [vmem:[%s175 + $0x8] sm:$0xff] %v371
      %s374 = smul.u32 2, %s14
      %p375 = scmp.lt.s32.totalorder %s374, 3
      %s376 = scalar_select %p375, %s374, 3
      %s377 = smul.addr %s376, 8
      %s378 = scalar_lea.vmem %s3, %s377
      // Predicated region
      $region33: #{encoder_forward.6} parent=31 // pred_check
        %p379 = pneg %p100
      $region34: #{encoder_forward.6} parent=31 // pred_check_branch
        %381 = sbr.rel (%p379) target = $region36
      $region35: #{encoder_forward.6} parent=31 // pred_region
        %s382 = smul.u32 2, %s14
      $region36: #{encoder_forward.6} parent=31 // pred_fallthru
        _
    $region32: #{encoder_forward.6} parent=5 // pred_fallthru
      _
    %p383 = scmp.le.s32.totalorder 2, %s9
    // Predicated region
    $region37: #{encoder_forward.6} parent=5 // pred_check
      %p384 = pneg %p383
    $region38: #{encoder_forward.6} parent=5 // pred_check_branch
      %386 = sbr.rel (%p384) target = $region40
    $region39: #{encoder_forward.6} parent=5 // pred_region
      %s387 = ssub.s32 %s9, 2
      // Predicated region
      $region41: #{encoder_forward.6} parent=39 // pred_check
        %p388 = pneg %p106
      $region42: #{encoder_forward.6} parent=39 // pred_check_branch
        %390 = sbr.rel (%p388) target = $region44
      $region43: #{encoder_forward.6} parent=39 // pred_region
        %s391 = smul.u32 2, %s15
        %p392 = scmp.lt.s32.totalorder %s391, 3
        %s393 = scalar_select %p392, %s391, 3
        %s394 = smul.addr %s393, 8
        %s395 = scalar_lea.vmem %s3, %s394
      $region44: #{encoder_forward.6} parent=39 // pred_fallthru
        _
    $region40: #{encoder_forward.6} parent=5 // pred_fallthru
      _
  $region6: #{encoder_forward.6} parent=0 // loop_footer
    %s13 = sadd.s32 1, %s9
  $region7: #{encoder_forward.6} parent=0 // loop_footer_branch
    %8 = sbr.rel target = $region3
  $region8: #{encoder_forward.6} parent=0 // loop_exit
    _

// kernel: encoder_forward.7
$region0: #{encoder_forward.7}
  #allocation0 [shape = 'u32[]', space=smem, size = 0x4, offset = 0x4, fixed_abs, tag = 'smem constant byte address 0x4 - core index']
  #allocation1 [shape = 'u32[144,128]{1,0:T(1,128)}', space=vmem, size = 0x12000, scoped, tag = 'internal scratch']
  %s0 = inlined_call_operand.vmem [shape: bf16[16,512], index: 0, kind: input, shape index: {}]
  %s1 = inlined_call_operand.vmem [shape: bf16[512,128], index: 1, kind: input, shape index: {}]
  %s2 = inlined_call_operand.vmem [shape: f32[1,128], index: 2, kind: input, shape index: {}]
  %s3 = inlined_call_operand.vmem [shape: f32[16,128], index: 3, kind: output, shape index: {}]
  %s4 = sld [smem:[#allocation0]]
  $region22: #{encoder_forward.7} parent=0
    _
  %s6 = ssub.s32 1, %s4
  %s7 = scalar_select 0, %s6, %s4
  // Predicated region
  $region2: #{encoder_forward.7} parent=0 // pred_check
    _
  $region3: #{encoder_forward.7} parent=0 // pred_check_branch
    %9 = sbr.rel (0) target = $region5
  $region4: #{encoder_forward.7} parent=0 // pred_region
    _
  $region5: #{encoder_forward.7} parent=0 // pred_fallthru
    _
  // Predicated region
  $region6: #{encoder_forward.7} parent=0 // pred_check
    _
  $region7: #{encoder_forward.7} parent=0 // pred_check_branch
    %11 = sbr.rel (0) target = $region9
  $region8: #{encoder_forward.7} parent=0 // pred_region
    _
  $region9: #{encoder_forward.7} parent=0 // pred_fallthru
    _
  // Predicated region
  $region10: #{encoder_forward.7} parent=0 // pred_check
    _
  $region11: #{encoder_forward.7} parent=0 // pred_check_branch
    %13 = sbr.rel (0) target = $region13
  $region12: #{encoder_forward.7} parent=0 // pred_region
    _
  $region13: #{encoder_forward.7} parent=0 // pred_fallthru
    _
  %v15 = vld [vmem:[%s0] sm:$0xff]
  %v16 = vld [vmem:[%s0 + $0x8] sm:$0xff]
  %v17 = vld [vmem:[%s0 + $0x10] sm:$0xff]
  %v18 = vld [vmem:[%s0 + $0x18] sm:$0xff]
  %v19 = vld [vmem:[%s1] sm:$0xf]
  %v20 = vld [vmem:[%s1 + $0x4] sm:$0xf]
  %v21 = vld [vmem:[%s1 + $0x8] sm:$0xf]
  %v22 = vld [vmem:[%s1 + $0xc] sm:$0xf]
  %v23 = vld [vmem:[%s1 + $0x10] sm:$0xf]
  %v24 = vld [vmem:[%s1 + $0x14] sm:$0xf]
  %v25 = vld [vmem:[%s1 + $0x18] sm:$0xf]
  %v26 = vld [vmem:[%s1 + $0x1c] sm:$0xf]
  %v27 = vld [vmem:[%s1 + $0x20] sm:$0xf]
  %v28 = vld [vmem:[%s1 + $0x24] sm:$0xf]
  %v29 = vld [vmem:[%s1 + $0x28] sm:$0xf]
  %v30 = vld [vmem:[%s1 + $0x2c] sm:$0xf]
  %v31 = vld [vmem:[%s1 + $0x30] sm:$0xf]
  %v32 = vld [vmem:[%s1 + $0x34] sm:$0xf]
  %v33 = vld [vmem:[%s1 + $0x38] sm:$0xf]
  %v34 = vld [vmem:[%s1 + $0x3c] sm:$0xf]
  %v35 = vld [vmem:[%s1 + $0x40] sm:$0xf]
  %v36 = vld [vmem:[%s1 + $0x44] sm:$0xf]
  %v37 = vld [vmem:[%s1 + $0x48] sm:$0xf]
  %v38 = vld [vmem:[%s1 + $0x4c] sm:$0xf]
  %v39 = vld [vmem:[%s1 + $0x50] sm:$0xf]
  %v40 = vld [vmem:[%s1 + $0x54] sm:$0xf]
  %v41 = vld [vmem:[%s1 + $0x58] sm:$0xf]
  %v42 = vld [vmem:[%s1 + $0x5c] sm:$0xf]
  %v43 = vld [vmem:[%s1 + $0x60] sm:$0xf]
  %v44 = vld [vmem:[%s1 + $0x64] sm:$0xf]
  %v45 = vld [vmem:[%s1 + $0x68] sm:$0xf]
  %v46 = vld [vmem:[%s1 + $0x6c] sm:$0xf]
  %v47 = vld [vmem:[%s1 + $0x70] sm:$0xf]
  %v48 = vld [vmem:[%s1 + $0x74] sm:$0xf]
  %v49 = vld [vmem:[%s1 + $0x78] sm:$0xf]
  %v50 = vld [vmem:[%s1 + $0x7c] sm:$0xf]
  %v51 = vld [vmem:[%s1 + $0x80] sm:$0xf]
  %v52 = vld [vmem:[%s1 + $0x84] sm:$0xf]
  %v53 = vld [vmem:[%s1 + $0x88] sm:$0xf]
  %v54 = vld [vmem:[%s1 + $0x8c] sm:$0xf]
  %v55 = vld [vmem:[%s1 + $0x90] sm:$0xf]
  %v56 = vld [vmem:[%s1 + $0x94] sm:$0xf]
  %v57 = vld [vmem:[%s1 + $0x98] sm:$0xf]
  %v58 = vld [vmem:[%s1 + $0x9c] sm:$0xf]
  %v59 = vld [vmem:[%s1 + $0xa0] sm:$0xf]
  %v60 = vld [vmem:[%s1 + $0xa4] sm:$0xf]
  %v61 = vld [vmem:[%s1 + $0xa8] sm:$0xf]
  %v62 = vld [vmem:[%s1 + $0xac] sm:$0xf]
  %v63 = vld [vmem:[%s1 + $0xb0] sm:$0xf]
  %v64 = vld [vmem:[%s1 + $0xb4] sm:$0xf]
  %v65 = vld [vmem:[%s1 + $0xb8] sm:$0xf]
  %v66 = vld [vmem:[%s1 + $0xbc] sm:$0xf]
  %v67 = vld [vmem:[%s1 + $0xc0] sm:$0xf]
  %v68 = vld [vmem:[%s1 + $0xc4] sm:$0xf]
  %v69 = vld [vmem:[%s1 + $0xc8] sm:$0xf]
  %v70 = vld [vmem:[%s1 + $0xcc] sm:$0xf]
  %v71 = vld [vmem:[%s1 + $0xd0] sm:$0xf]
  %v72 = vld [vmem:[%s1 + $0xd4] sm:$0xf]
  %v73 = vld [vmem:[%s1 + $0xd8] sm:$0xf]
  %v74 = vld [vmem:[%s1 + $0xdc] sm:$0xf]
  %v75 = vld [vmem:[%s1 + $0xe0] sm:$0xf]
  %v76 = vld [vmem:[%s1 + $0xe4] sm:$0xf]
  %v77 = vld [vmem:[%s1 + $0xe8] sm:$0xf]
  %v78 = vld [vmem:[%s1 + $0xec] sm:$0xf]
  %v79 = vld [vmem:[%s1 + $0xf0] sm:$0xf]
  %v80 = vld [vmem:[%s1 + $0xf4] sm:$0xf]
  %v81 = vld [vmem:[%s1 + $0xf8] sm:$0xf]
  %v82 = vld [vmem:[%s1 + $0xfc] sm:$0xf]
  %v83 = vld [vmem:[%s2] sm:$0x1]
  %v85 = vlaneseq
  %v86 = vshrl.u32 %v85, 7
  %v87 = vsub.s32 0, %v86
  %v88 = vrot.slane %v83, %v87
  %v94 = vunpack.c.l.b16 %v15
  %v95 = vunpack.c.h.b16 %v15
  %v96 = vunpack.c.l.b16 %v16
  %v97 = vunpack.c.h.b16 %v16
  %v98 = vunpack.c.l.b16 %v17
  %v99 = vunpack.c.h.b16 %v17
  %v100 = vunpack.c.l.b16 %v18
  %v101 = vunpack.c.h.b16 %v18
  %v102 = vpack.c.b16 %v98, %v94
  %v103 = vpack.c.b16 %v99, %v95
  %v104 = vpack.c.b16 %v100, %v96
  %v105 = vpack.c.b16 %v101, %v97
  %v174 = vunpack.c.l.b16 %v19
  %v175 = vunpack.c.l.b16 %v20
  %v176 = vunpack.c.l.b16 %v21
  %v177 = vunpack.c.l.b16 %v22
  %v178 = vunpack.c.l.b16 %v23
  %v179 = vunpack.c.l.b16 %v24
  %v180 = vunpack.c.l.b16 %v25
  %v181 = vunpack.c.l.b16 %v26
  %v182 = vunpack.c.l.b16 %v27
  %v183 = vunpack.c.l.b16 %v28
  %v184 = vunpack.c.l.b16 %v29
  %v185 = vunpack.c.l.b16 %v30
  %v186 = vunpack.c.l.b16 %v31
  %v187 = vunpack.c.l.b16 %v32
  %v188 = vunpack.c.l.b16 %v33
  %v189 = vunpack.c.l.b16 %v34
  %v190 = vunpack.c.l.b16 %v35
  %v191 = vunpack.c.l.b16 %v36
  %v192 = vunpack.c.l.b16 %v37
  %v193 = vunpack.c.l.b16 %v38
  %v194 = vunpack.c.l.b16 %v39
  %v195 = vunpack.c.l.b16 %v40
  %v196 = vunpack.c.l.b16 %v41
  %v197 = vunpack.c.l.b16 %v42
  %v198 = vunpack.c.l.b16 %v43
  %v199 = vunpack.c.l.b16 %v44
  %v200 = vunpack.c.l.b16 %v45
  %v201 = vunpack.c.l.b16 %v46
  %v202 = vunpack.c.l.b16 %v47
  %v203 = vunpack.c.l.b16 %v48
  %v204 = vunpack.c.l.b16 %v49
  %v205 = vunpack.c.l.b16 %v50
  %v206 = vunpack.c.l.b16 %v51
  %v207 = vunpack.c.l.b16 %v52
  %v208 = vunpack.c.l.b16 %v53
  %v209 = vunpack.c.l.b16 %v54
  %v210 = vunpack.c.l.b16 %v55
  %v211 = vunpack.c.l.b16 %v56
  %v212 = vunpack.c.l.b16 %v57
  %v213 = vunpack.c.l.b16 %v58
  %v214 = vunpack.c.l.b16 %v59
  %v215 = vunpack.c.l.b16 %v60
  %v216 = vunpack.c.l.b16 %v61
  %v217 = vunpack.c.l.b16 %v62
  %v218 = vunpack.c.l.b16 %v63
  %v219 = vunpack.c.l.b16 %v64
  %v220 = vunpack.c.l.b16 %v65
  %v221 = vunpack.c.l.b16 %v66
  %v222 = vunpack.c.l.b16 %v67
  %v223 = vunpack.c.l.b16 %v68
  %v224 = vunpack.c.l.b16 %v69
  %v225 = vunpack.c.l.b16 %v70
  %v226 = vunpack.c.l.b16 %v71
  %v227 = vunpack.c.l.b16 %v72
  %v228 = vunpack.c.l.b16 %v73
  %v229 = vunpack.c.l.b16 %v74
  %v230 = vunpack.c.l.b16 %v75
  %v231 = vunpack.c.l.b16 %v76
  %v232 = vunpack.c.l.b16 %v77
  %v233 = vunpack.c.l.b16 %v78
  %v234 = vunpack.c.l.b16 %v79
  %v235 = vunpack.c.l.b16 %v80
  %v236 = vunpack.c.l.b16 %v81
  %v237 = vunpack.c.l.b16 %v82
  %v238 = vpack.c.b16 %v175, %v174
  %v239 = vpack.c.b16 %v177, %v176
  %v240 = vpack.c.b16 %v179, %v178
  %v241 = vpack.c.b16 %v181, %v180
  %v242 = vpack.c.b16 %v183, %v182
  %v243 = vpack.c.b16 %v185, %v184
  %v244 = vpack.c.b16 %v187, %v186
  %v245 = vpack.c.b16 %v189, %v188
  %v246 = vpack.c.b16 %v191, %v190
  %v247 = vpack.c.b16 %v193, %v192
  %v248 = vpack.c.b16 %v195, %v194
  %v249 = vpack.c.b16 %v197, %v196
  %v250 = vpack.c.b16 %v199, %v198
  %v251 = vpack.c.b16 %v201, %v200
  %v252 = vpack.c.b16 %v203, %v202
  %v253 = vpack.c.b16 %v205, %v204
  %v254 = vpack.c.b16 %v207, %v206
  %v255 = vpack.c.b16 %v209, %v208
  %v256 = vpack.c.b16 %v211, %v210
  %v257 = vpack.c.b16 %v213, %v212
  %v258 = vpack.c.b16 %v215, %v214
  %v259 = vpack.c.b16 %v217, %v216
  %v260 = vpack.c.b16 %v219, %v218
  %v261 = vpack.c.b16 %v221, %v220
  %v262 = vpack.c.b16 %v223, %v222
  %v263 = vpack.c.b16 %v225, %v224
  %v264 = vpack.c.b16 %v227, %v226
  %v265 = vpack.c.b16 %v229, %v228
  %v266 = vpack.c.b16 %v231, %v230
  %v267 = vpack.c.b16 %v233, %v232
  %v268 = vpack.c.b16 %v235, %v234
  %v269 = vpack.c.b16 %v237, %v236
  %302 = vmatprep.subr.bf16.mxu0 0
  %303 = vmatpush1.bf16.msra.mxu0 %v238
  %304 = vmatprep.subr.bf16.mxu0 0
  %305 = vmatpush1.bf16.msra.mxu0 %v239
  %306 = vmatprep.subr.bf16.mxu0 0
  %307 = vmatpush1.bf16.msra.mxu0 %v240
  %308 = vmatprep.subr.bf16.mxu0 0
  %309 = vmatpush1.bf16.msra.mxu0 %v241
  %310 = vmatprep.subr.bf16.mxu0 0
  %311 = vmatpush1.bf16.msra.mxu0 %v242
  %312 = vmatprep.subr.bf16.mxu0 0
  %313 = vmatpush1.bf16.msra.mxu0 %v243
  %314 = vmatprep.subr.bf16.mxu0 0
  %315 = vmatpush1.bf16.msra.mxu0 %v244
  %316 = vmatprep.subr.bf16.mxu0 0
  %317 = vmatpush1.bf16.msra.mxu0 %v245
  %318 = vmatprep.subr.bf16.mxu0 0
  %319 = vmatpush1.bf16.msra.mxu0 %v246
  %320 = vmatprep.subr.bf16.mxu0 0
  %321 = vmatpush1.bf16.msra.mxu0 %v247
  %322 = vmatprep.subr.bf16.mxu0 0
  %323 = vmatpush1.bf16.msra.mxu0 %v248
  %324 = vmatprep.subr.bf16.mxu0 0
  %325 = vmatpush1.bf16.msra.mxu0 %v249
  %326 = vmatprep.subr.bf16.mxu0 0
  %327 = vmatpush1.bf16.msra.mxu0 %v250
  %328 = vmatprep.subr.bf16.mxu0 0
  %329 = vmatpush1.bf16.msra.mxu0 %v251
  %330 = vmatprep.subr.bf16.mxu0 0
  %331 = vmatpush1.bf16.msra.mxu0 %v252
  %332 = vmatprep.subr.bf16.mxu0 0
  %333 = vmatpush1.bf16.msra.mxu0 %v253
  %334 = vmatprep.mubr.bf16.mxu0 %v103
  %335 = vmatmul.mubr.bf16.gmra.mrb[0].mxu0 %v102
  %v336 = vpop.f32.mrb[0].mxu0
  %v337 = vadd.f32 %v88, %v336
  %v338 = vpop.f32.mrb[0].mxu0
  %v339 = vpop.f32.mrb[0].mxu0
  %v340 = vadd.f32 %v88, %v339
  %v341 = vpop.f32.mrb[0].mxu0
  %342 = vdwg.mxu0
  %343 = vmatprep.subr.bf16.mxu0 0
  %344 = vmatpush1.bf16.msra.mxu0 %v254
  %345 = vmatprep.subr.bf16.mxu0 0
  %346 = vmatpush1.bf16.msra.mxu0 %v255
  %347 = vmatprep.subr.bf16.mxu0 0
  %348 = vmatpush1.bf16.msra.mxu0 %v256
  %349 = vmatprep.subr.bf16.mxu0 0
  %350 = vmatpush1.bf16.msra.mxu0 %v257
  %351 = vmatprep.subr.bf16.mxu0 0
  %352 = vmatpush1.bf16.msra.mxu0 %v258
  %353 = vmatprep.subr.bf16.mxu0 0
  %354 = vmatpush1.bf16.msra.mxu0 %v259
  %355 = vmatprep.subr.bf16.mxu0 0
  %356 = vmatpush1.bf16.msra.mxu0 %v260
  %357 = vmatprep.subr.bf16.mxu0 0
  %358 = vmatpush1.bf16.msra.mxu0 %v261
  %359 = vmatprep.subr.bf16.mxu0 0
  %360 = vmatpush1.bf16.msra.mxu0 %v262
  %361 = vmatprep.subr.bf16.mxu0 0
  %362 = vmatpush1.bf16.msra.mxu0 %v263
  %363 = vmatprep.subr.bf16.mxu0 0
  %364 = vmatpush1.bf16.msra.mxu0 %v264
  %365 = vmatprep.subr.bf16.mxu0 0
  %366 = vmatpush1.bf16.msra.mxu0 %v265
  %367 = vmatprep.subr.bf16.mxu0 0
  %368 = vmatpush1.bf16.msra.mxu0 %v266
  %369 = vmatprep.subr.bf16.mxu0 0
  %370 = vmatpush1.bf16.msra.mxu0 %v267
  %371 = vmatprep.subr.bf16.mxu0 0
  %372 = vmatpush1.bf16.msra.mxu0 %v268
  %373 = vmatprep.subr.bf16.mxu0 0
  %374 = vmatpush1.bf16.msra.mxu0 %v269
  %375 = vmatprep.mubr.bf16.mxu0 %v105
  %376 = vmatmul.mubr.bf16.gmra.mrb[0].mxu0 %v104
  %v377 = vpop.f32.mrb[0].mxu0
  %v378 = vadd.f32 %v337, %v377
  %v379 = vpop.f32.mrb[0].mxu0
  %v380 = vpop.f32.mrb[0].mxu0
  %v381 = vadd.f32 %v340, %v380
  %v382 = vpop.f32.mrb[0].mxu0
  %383 = vdwg.mxu0
  %384 = vst [vmem:[%s3] sm:$0xff] %v378
  %385 = vst [vmem:[%s3 + $0x8] sm:$0xff] %v381
  // Predicated region
  $region14: #{encoder_forward.7} parent=0 // pred_check
    _
  $region15: #{encoder_forward.7} parent=0 // pred_check_branch
    %387 = sbr.rel (0) target = $region17
  $region16: #{encoder_forward.7} parent=0 // pred_region
    _
  $region17: #{encoder_forward.7} parent=0 // pred_fallthru
    _
  // Predicated region
  $region18: #{encoder_forward.7} parent=0 // pred_check
    _
  $region19: #{encoder_forward.7} parent=0 // pred_check_branch
    %389 = sbr.rel (0) target = $region21
  $region20: #{encoder_forward.7} parent=0 // pred_region
    _
  $region21: #{encoder_forward.7} parent=0 // pred_fallthru
    _

</llo_original>
